<compile_context>
chip_gen: v7x
topology: tpu7x:2x2x1
jax: 0.10.0
libtpu: 0.0.40
codegen_flags: <defaults>
</compile_context>

<pallas_src>
import math

import jax
import jax.numpy as jnp
from jax.experimental import pallas as pl
from jax.experimental.pallas import tpu as pltpu

# ---- problem sizes (small, consistent with the module) ----
B = 2          # batch
S = 8          # sequence length (tokens/patches)
E = 32         # embedding_dim
H = 4          # num_heads
DH = E // H    # head dim
LN_EPS = 1e-5  # torch.nn.LayerNorm default


def msa_kernel(x_ref, gamma_ref, beta_ref,
               wqkv_ref, bqkv_ref,
               wo_ref, bo_ref,
               o_ref):
    # x_ref: (B*S, E) -- entire batch in one grid step.
    x = x_ref[...].astype(jnp.float32)

    # ---- LayerNorm over the embedding dim (f32, biased variance like torch) ----
    mean = jnp.mean(x, axis=-1, keepdims=True)
    var = jnp.mean((x - mean) ** 2, axis=-1, keepdims=True)
    xn = (x - mean) * jax.lax.rsqrt(var + LN_EPS)
    xn = xn * gamma_ref[...] + beta_ref[...]                            # (B*S, E)

    # ---- fused QKV projection: one MXU pass (bf16 operands, f32 accumulate) ----
    qkv = jnp.dot(xn.astype(jnp.bfloat16),
                  wqkv_ref[...].astype(jnp.bfloat16),
                  preferred_element_type=jnp.float32) + bqkv_ref[...]   # (B*S, 3E)

    scale = 1.0 / math.sqrt(DH)

    # ---- per-head attention, batched over B via einsum (H = 4 static iterations) ----
    head_ctx = []
    for h in range(H):
        lo = h * DH
        qh = (qkv[:, lo:lo + DH] * scale).reshape(B, S, DH)             # (B, S, DH)
        kh = qkv[:, E + lo:E + lo + DH].reshape(B, S, DH)
        vh = qkv[:, 2 * E + lo:2 * E + lo + DH].reshape(B, S, DH)

        # q @ k^T via last-axis contraction, batched over B (no explicit transpose)
        s = jnp.einsum('bqd,bkd->bqk', qh, kh,
                       preferred_element_type=jnp.float32)              # (B, S, S)
        s = s - jnp.max(s, axis=-1, keepdims=True)
        p = jnp.exp(s)
        p = p * pl.reciprocal(jnp.sum(p, axis=-1, keepdims=True), approx=True)

        ctx_h = jnp.einsum('bqk,bkd->bqd', p, vh,
                           preferred_element_type=jnp.float32)          # (B, S, DH)
        head_ctx.append(ctx_h.reshape(B * S, DH))
    ctx = jnp.concatenate(head_ctx, axis=-1)                            # (B*S, E)

    # ---- single full-width output projection ----
    out = jnp.dot(ctx.astype(jnp.bfloat16), wo_ref[...].astype(jnp.bfloat16),
                  preferred_element_type=jnp.float32) + bo_ref[...]
    o_ref[...] = out.astype(o_ref.dtype)


def msa_block(x, gamma, beta, w_qkv, b_qkv, wo, bo):
    # x: (B, S, E); w_qkv: (E, 3E) pre-transposed; b_qkv: (1, 3E); wo: (E, E); bo: (1, E)
    Bx, Sx, Ex = x.shape
    x2d = x.reshape(Bx * Sx, Ex)   # stack batch along rows (free reshape outside the kernel)

    # TODO(synk): on v7x a 2-wide "parallel" batch grid axis would use both TensorCores;
    # on v5e/v6e (1 TC) the fully collapsed grid below is strictly better.
    out2d = pl.pallas_call(
        msa_kernel,
        out_shape=jax.ShapeDtypeStruct((Bx * Sx, Ex), x.dtype),
        grid_spec=pltpu.PrefetchScalarGridSpec(
            num_scalar_prefetch=0,
            grid=(1,),
            in_specs=[
                pl.BlockSpec((Bx * Sx, Ex), lambda i: (0, 0)),   # x (batch-stacked)
                pl.BlockSpec((1, Ex), lambda i: (0, 0)),         # gamma
                pl.BlockSpec((1, Ex), lambda i: (0, 0)),         # beta
                pl.BlockSpec((Ex, 3 * Ex), lambda i: (0, 0)),    # fused W_qkv
                pl.BlockSpec((1, 3 * Ex), lambda i: (0, 0)),     # fused b_qkv
                pl.BlockSpec((Ex, Ex), lambda i: (0, 0)),        # wo
                pl.BlockSpec((1, Ex), lambda i: (0, 0)),         # bo
            ],
            out_specs=pl.BlockSpec((Bx * Sx, Ex), lambda i: (0, 0)),
        ),
        compiler_params=pltpu.CompilerParams(dimension_semantics=("arbitrary",)),
    )(x2d, gamma, beta, w_qkv, b_qkv, wo, bo)
    return out2d.reshape(Bx, Sx, Ex)


def reference(x, gamma, beta, w_qkv, b_qkv, wo, bo):
    # pure-JAX mirror of the PyTorch forward (float32)
    mean = jnp.mean(x, axis=-1, keepdims=True)
    var = jnp.mean((x - mean) ** 2, axis=-1, keepdims=True)
    xn = (x - mean) / jnp.sqrt(var + LN_EPS) * gamma[0] + beta[0]
    wq, wk, wv = w_qkv[:, :E], w_qkv[:, E:2 * E], w_qkv[:, 2 * E:]
    bq, bk, bv = b_qkv[0, :E], b_qkv[0, E:2 * E], b_qkv[0, 2 * E:]
    q = xn @ wq + bq
    k = xn @ wk + bk
    v = xn @ wv + bv
    qh = q.reshape(B, S, H, DH).transpose(0, 2, 1, 3)
    kh = k.reshape(B, S, H, DH).transpose(0, 2, 1, 3)
    vh = v.reshape(B, S, H, DH).transpose(0, 2, 1, 3)
    scores = jnp.einsum('bhqd,bhkd->bhqk', qh, kh) / math.sqrt(DH)
    p = jax.nn.softmax(scores, axis=-1)
    oh = jnp.einsum('bhqk,bhkd->bhqd', p, vh)
    o = oh.transpose(0, 2, 1, 3).reshape(B, S, E)
    return o @ wo + bo[0]


if __name__ == "__main__":
    key = jax.random.PRNGKey(0)
    keys = jax.random.split(key, 6)

    x = jax.random.normal(keys[0], (B, S, E), jnp.float32)

    # LayerNorm params (torch default: gamma=1, beta=0; perturbed deterministically)
    gamma = (jnp.ones((1, E), jnp.float32)
             + 0.1 * jax.random.normal(keys[1], (1, E), jnp.float32))
    beta = 0.1 * jax.random.normal(keys[2], (1, E), jnp.float32)

    # nn.MultiheadAttention params: in_proj_weight (3E, E), in_proj_bias (3E,),
    # out_proj.weight (E, E), out_proj.bias (E,)
    in_proj_weight = 0.05 * jax.random.normal(keys[3], (3 * E, E), jnp.float32)
    in_proj_bias = 0.05 * jax.random.normal(keys[4], (3 * E,), jnp.float32)
    out_proj_weight = 0.05 * jax.random.normal(keys[5], (E, E), jnp.float32)
    out_proj_bias = jnp.zeros((E,), jnp.float32)

    # pre-transpose / fuse so the kernel does x @ W (PyTorch computes x @ W.T):
    #   W_qkv = [Wq^T | Wk^T | Wv^T]  -> (E, 3E)
    w_qkv = in_proj_weight.T                    # (E, 3E), columns 0:E = Q, E:2E = K, 2E:3E = V
    b_qkv = in_proj_bias.reshape(1, 3 * E)
    wo = out_proj_weight.T
    bo = out_proj_bias.reshape(1, E)

    out = msa_block(x, gamma, beta, w_qkv, b_qkv, wo, bo)
    out = jax.block_until_ready(out)

    ref = reference(x, gamma, beta, w_qkv, b_qkv, wo, bo)
    assert out.shape == (B, S, E)
    # tolerance loosened because projection MXU operands are bf16 (f32 accumulation)
    assert jnp.allclose(out, ref, atol=2e-2, rtol=2e-2), "mismatch vs reference"

    print("KERNEL_OK")
</pallas_src>

<mosaic_0001>
module attributes {stable_mosaic.version = 11 : i64} {
  func.func @msa_kernel(%arg0: i32, %arg1: memref<16x32xf32, #tpu.memory_space<vmem>>, %arg2: memref<1x32xf32, #tpu.memory_space<vmem>>, %arg3: memref<1x32xf32, #tpu.memory_space<vmem>>, %arg4: memref<32x96xf32, #tpu.memory_space<vmem>>, %arg5: memref<1x96xf32, #tpu.memory_space<vmem>>, %arg6: memref<32x32xf32, #tpu.memory_space<vmem>>, %arg7: memref<1x32xf32, #tpu.memory_space<vmem>>, %arg8: memref<16x32xf32, #tpu.memory_space<vmem>>) attributes {dimension_semantics = [#tpu.dimension_semantics<arbitrary>], iteration_bounds = array<i64: 1>, scalar_prefetch = 0 : i64, scratch_operands = 0 : i64, tpu.core_type = #tpu.core_type<tc>, window_params = [{pipeline_mode = #tpu.pipeline_mode<synchronous>, transform_indices = @transform_0, window_bounds = array<i64: 16, 32>}, {pipeline_mode = #tpu.pipeline_mode<synchronous>, transform_indices = @transform_1, window_bounds = array<i64: 1, 32>}, {pipeline_mode = #tpu.pipeline_mode<synchronous>, transform_indices = @transform_2, window_bounds = array<i64: 1, 32>}, {pipeline_mode = #tpu.pipeline_mode<synchronous>, transform_indices = @transform_3, window_bounds = array<i64: 32, 96>}, {pipeline_mode = #tpu.pipeline_mode<synchronous>, transform_indices = @transform_4, window_bounds = array<i64: 1, 96>}, {pipeline_mode = #tpu.pipeline_mode<synchronous>, transform_indices = @transform_5, window_bounds = array<i64: 32, 32>}, {pipeline_mode = #tpu.pipeline_mode<synchronous>, transform_indices = @transform_6, window_bounds = array<i64: 1, 32>}, {pipeline_mode = #tpu.pipeline_mode<synchronous>, transform_indices = @transform_7, window_bounds = array<i64: 16, 32>}]} {
    %c0 = arith.constant 0 : index
    %c0_0 = arith.constant 0 : index
    %0 = vector.load %arg1[%c0, %c0_0] : memref<16x32xf32, #tpu.memory_space<vmem>>, vector<16x32xf32>
    %cst = arith.constant dense<0.000000e+00> : vector<16xf32>
    %1 = vector.multi_reduction <add>, %0, %cst [1] : vector<16x32xf32> to vector<16xf32>
    %2 = vector.shape_cast %1 : vector<16xf32> to vector<16x1xf32>
    %cst_1 = arith.constant 3.200000e+01 : f32
    %3 = vector.broadcast %cst_1 : f32 to vector<16x1xf32>
    %4 = arith.divf %2, %3 : vector<16x1xf32>
    %5 = vector.broadcast %4 : vector<16x1xf32> to vector<16x32xf32>
    %6 = arith.subf %0, %5 : vector<16x32xf32>
    %7 = arith.mulf %6, %6 : vector<16x32xf32>
    %cst_2 = arith.constant dense<0.000000e+00> : vector<16xf32>
    %8 = vector.multi_reduction <add>, %7, %cst_2 [1] : vector<16x32xf32> to vector<16xf32>
    %9 = vector.shape_cast %8 : vector<16xf32> to vector<16x1xf32>
    %cst_3 = arith.constant 3.200000e+01 : f32
    %10 = vector.broadcast %cst_3 : f32 to vector<16x1xf32>
    %11 = arith.divf %9, %10 : vector<16x1xf32>
    %12 = vector.broadcast %4 : vector<16x1xf32> to vector<16x32xf32>
    %13 = arith.subf %0, %12 : vector<16x32xf32>
    %cst_4 = arith.constant 9.99999974E-6 : f32
    %14 = vector.broadcast %cst_4 : f32 to vector<16x1xf32>
    %15 = arith.addf %11, %14 : vector<16x1xf32>
    %16 = math.rsqrt %15 : vector<16x1xf32>
    %17 = vector.broadcast %16 : vector<16x1xf32> to vector<16x32xf32>
    %18 = arith.mulf %13, %17 : vector<16x32xf32>
    %c0_5 = arith.constant 0 : index
    %c0_6 = arith.constant 0 : index
    %19 = vector.load %arg2[%c0_5, %c0_6] : memref<1x32xf32, #tpu.memory_space<vmem>>, vector<1x32xf32>
    %20 = vector.broadcast %19 : vector<1x32xf32> to vector<16x32xf32>
    %21 = arith.mulf %18, %20 : vector<16x32xf32>
    %c0_7 = arith.constant 0 : index
    %c0_8 = arith.constant 0 : index
    %22 = vector.load %arg3[%c0_7, %c0_8] : memref<1x32xf32, #tpu.memory_space<vmem>>, vector<1x32xf32>
    %23 = vector.broadcast %22 : vector<1x32xf32> to vector<16x32xf32>
    %24 = arith.addf %21, %23 : vector<16x32xf32>
    %25 = arith.truncf %24 : vector<16x32xf32> to vector<16x32xbf16>
    %c0_9 = arith.constant 0 : index
    %c0_10 = arith.constant 0 : index
    %26 = vector.load %arg4[%c0_9, %c0_10] : memref<32x96xf32, #tpu.memory_space<vmem>>, vector<32x96xf32>
    %27 = arith.truncf %26 : vector<32x96xf32> to vector<32x96xbf16>
    %cst_11 = arith.constant dense<0.000000e+00> : vector<16x96xf32>
    %28 = tpu.matmul %25, %27, %cst_11 {dimension_numbers = #tpu.dot_dimension_numbers<[1], [0], [0], [1], [0, 0, 1, 1], [], []>} : vector<16x32xbf16>, vector<32x96xbf16>, vector<16x96xf32> -> vector<16x96xf32>
    %c0_12 = arith.constant 0 : index
    %c0_13 = arith.constant 0 : index
    %29 = vector.load %arg5[%c0_12, %c0_13] : memref<1x96xf32, #tpu.memory_space<vmem>>, vector<1x96xf32>
    %30 = vector.broadcast %29 : vector<1x96xf32> to vector<16x96xf32>
    %31 = arith.addf %28, %30 : vector<16x96xf32>
    %32 = vector.extract_strided_slice %31 {offsets = [0, 0], sizes = [16, 8], strides = [1, 1]} : vector<16x96xf32> to vector<16x8xf32>
    %cst_14 = arith.constant 0.353553385 : f32
    %33 = vector.broadcast %cst_14 : f32 to vector<16x8xf32>
    %34 = arith.mulf %32, %33 : vector<16x8xf32>
    %35 = vector.shape_cast %34 : vector<16x8xf32> to vector<2x8x8xf32>
    %36 = vector.extract_strided_slice %31 {offsets = [0, 32], sizes = [16, 8], strides = [1, 1]} : vector<16x96xf32> to vector<16x8xf32>
    %37 = vector.shape_cast %36 : vector<16x8xf32> to vector<2x8x8xf32>
    %38 = vector.extract_strided_slice %31 {offsets = [0, 64], sizes = [16, 8], strides = [1, 1]} : vector<16x96xf32> to vector<16x8xf32>
    %39 = vector.shape_cast %38 : vector<16x8xf32> to vector<2x8x8xf32>
    "tpu.trace_start"() <{level = 10 : i32, message = "bqd,bkd->bqk"}> : () -> ()
    %cst_15 = arith.constant dense<0.000000e+00> : vector<2x8x8xf32>
    %40 = tpu.matmul %35, %37, %cst_15 {dimension_numbers = #tpu.dot_dimension_numbers<[2], [2], [1], [1], [0, 0, 0, 1, 1, 1], [0], [0]>} : vector<2x8x8xf32>, vector<2x8x8xf32>, vector<2x8x8xf32> -> vector<2x8x8xf32>
    "tpu.trace_stop"() : () -> ()
    %cst_16 = arith.constant dense<0xFF800000> : vector<2x8xf32>
    %41 = vector.multi_reduction <maximumf>, %40, %cst_16 [2] : vector<2x8x8xf32> to vector<2x8xf32>
    %42 = vector.shape_cast %41 : vector<2x8xf32> to vector<2x8x1xf32>
    %43 = vector.broadcast %42 : vector<2x8x1xf32> to vector<2x8x8xf32>
    %44 = arith.subf %40, %43 : vector<2x8x8xf32>
    %45 = math.exp %44 : vector<2x8x8xf32>
    %cst_17 = arith.constant dense<0.000000e+00> : vector<2x8xf32>
    %46 = vector.multi_reduction <add>, %45, %cst_17 [2] : vector<2x8x8xf32> to vector<2x8xf32>
    %47 = vector.shape_cast %46 : vector<2x8xf32> to vector<2x8x1xf32>
    %48 = tpu.reciprocal %47 {approx = true} : vector<2x8x1xf32> -> vector<2x8x1xf32>
    %49 = vector.broadcast %48 : vector<2x8x1xf32> to vector<2x8x8xf32>
    %50 = arith.mulf %45, %49 : vector<2x8x8xf32>
    "tpu.trace_start"() <{level = 10 : i32, message = "bqk,bkd->bqd"}> : () -> ()
    %cst_18 = arith.constant dense<0.000000e+00> : vector<2x8x8xf32>
    %51 = tpu.matmul %50, %39, %cst_18 {dimension_numbers = #tpu.dot_dimension_numbers<[2], [1], [1], [2], [0, 0, 0, 1, 1, 2], [0], [0]>} : vector<2x8x8xf32>, vector<2x8x8xf32>, vector<2x8x8xf32> -> vector<2x8x8xf32>
    "tpu.trace_stop"() : () -> ()
    %52 = vector.shape_cast %51 : vector<2x8x8xf32> to vector<16x8xf32>
    %53 = vector.extract_strided_slice %31 {offsets = [0, 8], sizes = [16, 8], strides = [1, 1]} : vector<16x96xf32> to vector<16x8xf32>
    %cst_19 = arith.constant 0.353553385 : f32
    %54 = vector.broadcast %cst_19 : f32 to vector<16x8xf32>
    %55 = arith.mulf %53, %54 : vector<16x8xf32>
    %56 = vector.shape_cast %55 : vector<16x8xf32> to vector<2x8x8xf32>
    %57 = vector.extract_strided_slice %31 {offsets = [0, 40], sizes = [16, 8], strides = [1, 1]} : vector<16x96xf32> to vector<16x8xf32>
    %58 = vector.shape_cast %57 : vector<16x8xf32> to vector<2x8x8xf32>
    %59 = vector.extract_strided_slice %31 {offsets = [0, 72], sizes = [16, 8], strides = [1, 1]} : vector<16x96xf32> to vector<16x8xf32>
    %60 = vector.shape_cast %59 : vector<16x8xf32> to vector<2x8x8xf32>
    "tpu.trace_start"() <{level = 10 : i32, message = "bqd,bkd->bqk"}> : () -> ()
    %cst_20 = arith.constant dense<0.000000e+00> : vector<2x8x8xf32>
    %61 = tpu.matmul %56, %58, %cst_20 {dimension_numbers = #tpu.dot_dimension_numbers<[2], [2], [1], [1], [0, 0, 0, 1, 1, 1], [0], [0]>} : vector<2x8x8xf32>, vector<2x8x8xf32>, vector<2x8x8xf32> -> vector<2x8x8xf32>
    "tpu.trace_stop"() : () -> ()
    %cst_21 = arith.constant dense<0xFF800000> : vector<2x8xf32>
    %62 = vector.multi_reduction <maximumf>, %61, %cst_21 [2] : vector<2x8x8xf32> to vector<2x8xf32>
    %63 = vector.shape_cast %62 : vector<2x8xf32> to vector<2x8x1xf32>
    %64 = vector.broadcast %63 : vector<2x8x1xf32> to vector<2x8x8xf32>
    %65 = arith.subf %61, %64 : vector<2x8x8xf32>
    %66 = math.exp %65 : vector<2x8x8xf32>
    %cst_22 = arith.constant dense<0.000000e+00> : vector<2x8xf32>
    %67 = vector.multi_reduction <add>, %66, %cst_22 [2] : vector<2x8x8xf32> to vector<2x8xf32>
    %68 = vector.shape_cast %67 : vector<2x8xf32> to vector<2x8x1xf32>
    %69 = tpu.reciprocal %68 {approx = true} : vector<2x8x1xf32> -> vector<2x8x1xf32>
    %70 = vector.broadcast %69 : vector<2x8x1xf32> to vector<2x8x8xf32>
    %71 = arith.mulf %66, %70 : vector<2x8x8xf32>
    "tpu.trace_start"() <{level = 10 : i32, message = "bqk,bkd->bqd"}> : () -> ()
    %cst_23 = arith.constant dense<0.000000e+00> : vector<2x8x8xf32>
    %72 = tpu.matmul %71, %60, %cst_23 {dimension_numbers = #tpu.dot_dimension_numbers<[2], [1], [1], [2], [0, 0, 0, 1, 1, 2], [0], [0]>} : vector<2x8x8xf32>, vector<2x8x8xf32>, vector<2x8x8xf32> -> vector<2x8x8xf32>
    "tpu.trace_stop"() : () -> ()
    %73 = vector.shape_cast %72 : vector<2x8x8xf32> to vector<16x8xf32>
    %74 = vector.extract_strided_slice %31 {offsets = [0, 16], sizes = [16, 8], strides = [1, 1]} : vector<16x96xf32> to vector<16x8xf32>
    %cst_24 = arith.constant 0.353553385 : f32
    %75 = vector.broadcast %cst_24 : f32 to vector<16x8xf32>
    %76 = arith.mulf %74, %75 : vector<16x8xf32>
    %77 = vector.shape_cast %76 : vector<16x8xf32> to vector<2x8x8xf32>
    %78 = vector.extract_strided_slice %31 {offsets = [0, 48], sizes = [16, 8], strides = [1, 1]} : vector<16x96xf32> to vector<16x8xf32>
    %79 = vector.shape_cast %78 : vector<16x8xf32> to vector<2x8x8xf32>
    %80 = vector.extract_strided_slice %31 {offsets = [0, 80], sizes = [16, 8], strides = [1, 1]} : vector<16x96xf32> to vector<16x8xf32>
    %81 = vector.shape_cast %80 : vector<16x8xf32> to vector<2x8x8xf32>
    "tpu.trace_start"() <{level = 10 : i32, message = "bqd,bkd->bqk"}> : () -> ()
    %cst_25 = arith.constant dense<0.000000e+00> : vector<2x8x8xf32>
    %82 = tpu.matmul %77, %79, %cst_25 {dimension_numbers = #tpu.dot_dimension_numbers<[2], [2], [1], [1], [0, 0, 0, 1, 1, 1], [0], [0]>} : vector<2x8x8xf32>, vector<2x8x8xf32>, vector<2x8x8xf32> -> vector<2x8x8xf32>
    "tpu.trace_stop"() : () -> ()
    %cst_26 = arith.constant dense<0xFF800000> : vector<2x8xf32>
    %83 = vector.multi_reduction <maximumf>, %82, %cst_26 [2] : vector<2x8x8xf32> to vector<2x8xf32>
    %84 = vector.shape_cast %83 : vector<2x8xf32> to vector<2x8x1xf32>
    %85 = vector.broadcast %84 : vector<2x8x1xf32> to vector<2x8x8xf32>
    %86 = arith.subf %82, %85 : vector<2x8x8xf32>
    %87 = math.exp %86 : vector<2x8x8xf32>
    %cst_27 = arith.constant dense<0.000000e+00> : vector<2x8xf32>
    %88 = vector.multi_reduction <add>, %87, %cst_27 [2] : vector<2x8x8xf32> to vector<2x8xf32>
    %89 = vector.shape_cast %88 : vector<2x8xf32> to vector<2x8x1xf32>
    %90 = tpu.reciprocal %89 {approx = true} : vector<2x8x1xf32> -> vector<2x8x1xf32>
    %91 = vector.broadcast %90 : vector<2x8x1xf32> to vector<2x8x8xf32>
    %92 = arith.mulf %87, %91 : vector<2x8x8xf32>
    "tpu.trace_start"() <{level = 10 : i32, message = "bqk,bkd->bqd"}> : () -> ()
    %cst_28 = arith.constant dense<0.000000e+00> : vector<2x8x8xf32>
    %93 = tpu.matmul %92, %81, %cst_28 {dimension_numbers = #tpu.dot_dimension_numbers<[2], [1], [1], [2], [0, 0, 0, 1, 1, 2], [0], [0]>} : vector<2x8x8xf32>, vector<2x8x8xf32>, vector<2x8x8xf32> -> vector<2x8x8xf32>
    "tpu.trace_stop"() : () -> ()
    %94 = vector.shape_cast %93 : vector<2x8x8xf32> to vector<16x8xf32>
    %95 = vector.extract_strided_slice %31 {offsets = [0, 24], sizes = [16, 8], strides = [1, 1]} : vector<16x96xf32> to vector<16x8xf32>
    %cst_29 = arith.constant 0.353553385 : f32
    %96 = vector.broadcast %cst_29 : f32 to vector<16x8xf32>
    %97 = arith.mulf %95, %96 : vector<16x8xf32>
    %98 = vector.shape_cast %97 : vector<16x8xf32> to vector<2x8x8xf32>
    %99 = vector.extract_strided_slice %31 {offsets = [0, 56], sizes = [16, 8], strides = [1, 1]} : vector<16x96xf32> to vector<16x8xf32>
    %100 = vector.shape_cast %99 : vector<16x8xf32> to vector<2x8x8xf32>
    %101 = vector.extract_strided_slice %31 {offsets = [0, 88], sizes = [16, 8], strides = [1, 1]} : vector<16x96xf32> to vector<16x8xf32>
    %102 = vector.shape_cast %101 : vector<16x8xf32> to vector<2x8x8xf32>
    "tpu.trace_start"() <{level = 10 : i32, message = "bqd,bkd->bqk"}> : () -> ()
    %cst_30 = arith.constant dense<0.000000e+00> : vector<2x8x8xf32>
    %103 = tpu.matmul %98, %100, %cst_30 {dimension_numbers = #tpu.dot_dimension_numbers<[2], [2], [1], [1], [0, 0, 0, 1, 1, 1], [0], [0]>} : vector<2x8x8xf32>, vector<2x8x8xf32>, vector<2x8x8xf32> -> vector<2x8x8xf32>
    "tpu.trace_stop"() : () -> ()
    %cst_31 = arith.constant dense<0xFF800000> : vector<2x8xf32>
    %104 = vector.multi_reduction <maximumf>, %103, %cst_31 [2] : vector<2x8x8xf32> to vector<2x8xf32>
    %105 = vector.shape_cast %104 : vector<2x8xf32> to vector<2x8x1xf32>
    %106 = vector.broadcast %105 : vector<2x8x1xf32> to vector<2x8x8xf32>
    %107 = arith.subf %103, %106 : vector<2x8x8xf32>
    %108 = math.exp %107 : vector<2x8x8xf32>
    %cst_32 = arith.constant dense<0.000000e+00> : vector<2x8xf32>
    %109 = vector.multi_reduction <add>, %108, %cst_32 [2] : vector<2x8x8xf32> to vector<2x8xf32>
    %110 = vector.shape_cast %109 : vector<2x8xf32> to vector<2x8x1xf32>
    %111 = tpu.reciprocal %110 {approx = true} : vector<2x8x1xf32> -> vector<2x8x1xf32>
    %112 = vector.broadcast %111 : vector<2x8x1xf32> to vector<2x8x8xf32>
    %113 = arith.mulf %108, %112 : vector<2x8x8xf32>
    "tpu.trace_start"() <{level = 10 : i32, message = "bqk,bkd->bqd"}> : () -> ()
    %cst_33 = arith.constant dense<0.000000e+00> : vector<2x8x8xf32>
    %114 = tpu.matmul %113, %102, %cst_33 {dimension_numbers = #tpu.dot_dimension_numbers<[2], [1], [1], [2], [0, 0, 0, 1, 1, 2], [0], [0]>} : vector<2x8x8xf32>, vector<2x8x8xf32>, vector<2x8x8xf32> -> vector<2x8x8xf32>
    "tpu.trace_stop"() : () -> ()
    %115 = vector.shape_cast %114 : vector<2x8x8xf32> to vector<16x8xf32>
    %116 = tpu.concatenate %52, %73, %94, %115 in 1 : vector<16x8xf32>, vector<16x8xf32>, vector<16x8xf32>, vector<16x8xf32> -> vector<16x32xf32>
    %117 = arith.truncf %116 : vector<16x32xf32> to vector<16x32xbf16>
    %c0_34 = arith.constant 0 : index
    %c0_35 = arith.constant 0 : index
    %118 = vector.load %arg6[%c0_34, %c0_35] : memref<32x32xf32, #tpu.memory_space<vmem>>, vector<32x32xf32>
    %119 = arith.truncf %118 : vector<32x32xf32> to vector<32x32xbf16>
    %cst_36 = arith.constant dense<0.000000e+00> : vector<16x32xf32>
    %120 = tpu.matmul %117, %119, %cst_36 {dimension_numbers = #tpu.dot_dimension_numbers<[1], [0], [0], [1], [0, 0, 1, 1], [], []>} : vector<16x32xbf16>, vector<32x32xbf16>, vector<16x32xf32> -> vector<16x32xf32>
    %c0_37 = arith.constant 0 : index
    %c0_38 = arith.constant 0 : index
    %121 = vector.load %arg7[%c0_37, %c0_38] : memref<1x32xf32, #tpu.memory_space<vmem>>, vector<1x32xf32>
    %122 = vector.broadcast %121 : vector<1x32xf32> to vector<16x32xf32>
    %123 = arith.addf %120, %122 : vector<16x32xf32>
    %c0_39 = arith.constant 0 : index
    %c0_40 = arith.constant 0 : index
    %124 = vector.load %arg8[%c0_39, %c0_40] : memref<16x32xf32, #tpu.memory_space<vmem>>, vector<16x32xf32>
    tpu.vector_store %arg8[%c0_39, %c0_40], %123 {strides = array<i32>} : memref<16x32xf32, #tpu.memory_space<vmem>>, vector<16x32xf32>,
    return
  }
  func.func @transform_0(%arg0: i32) -> (i32, i32) {
    %c0_i32 = arith.constant 0 : i32
    %c0_i32_0 = arith.constant 0 : i32
    %c0_i32_1 = arith.constant 0 : i32
    return %c0_i32, %c0_i32_0 : i32, i32
  }
  func.func @transform_1(%arg0: i32) -> (i32, i32) {
    %c0_i32 = arith.constant 0 : i32
    %c0_i32_0 = arith.constant 0 : i32
    %c0_i32_1 = arith.constant 0 : i32
    return %c0_i32, %c0_i32_0 : i32, i32
  }
  func.func @transform_2(%arg0: i32) -> (i32, i32) {
    %c0_i32 = arith.constant 0 : i32
    %c0_i32_0 = arith.constant 0 : i32
    %c0_i32_1 = arith.constant 0 : i32
    return %c0_i32, %c0_i32_0 : i32, i32
  }
  func.func @transform_3(%arg0: i32) -> (i32, i32) {
    %c0_i32 = arith.constant 0 : i32
    %c0_i32_0 = arith.constant 0 : i32
    %c0_i32_1 = arith.constant 0 : i32
    return %c0_i32, %c0_i32_0 : i32, i32
  }
  func.func @transform_4(%arg0: i32) -> (i32, i32) {
    %c0_i32 = arith.constant 0 : i32
    %c0_i32_0 = arith.constant 0 : i32
    %c0_i32_1 = arith.constant 0 : i32
    return %c0_i32, %c0_i32_0 : i32, i32
  }
  func.func @transform_5(%arg0: i32) -> (i32, i32) {
    %c0_i32 = arith.constant 0 : i32
    %c0_i32_0 = arith.constant 0 : i32
    %c0_i32_1 = arith.constant 0 : i32
    return %c0_i32, %c0_i32_0 : i32, i32
  }
  func.func @transform_6(%arg0: i32) -> (i32, i32) {
    %c0_i32 = arith.constant 0 : i32
    %c0_i32_0 = arith.constant 0 : i32
    %c0_i32_1 = arith.constant 0 : i32
    return %c0_i32, %c0_i32_0 : i32, i32
  }
  func.func @transform_7(%arg0: i32) -> (i32, i32) {
    %c0_i32 = arith.constant 0 : i32
    %c0_i32_0 = arith.constant 0 : i32
    %c0_i32_1 = arith.constant 0 : i32
    return %c0_i32, %c0_i32_0 : i32, i32
  }
}

</mosaic_0001>

<llo_original>
// kernel: tpu_custom_call.1
$region0: #{tpu_custom_call.1}
  #allocation0 [shape = 'u32[]', space=smem, size = 0x4, offset = 0x4, fixed_abs, tag = 'smem constant byte address 0x4 - core index']
  #allocation1 [shape = 'u32[144,128]{1,0:T(1,128)}', space=vmem, size = 0x12000, scoped, tag = 'internal scratch']
  %s0 = inlined_call_operand.hbm [shape: f32[16,32], index: 0, kind: input, shape index: {}]
  %s1 = inlined_call_operand.vmem [shape: f32[1,32], index: 1, kind: input, shape index: {}]
  %s2 = inlined_call_operand.vmem [shape: f32[1,32], index: 2, kind: input, shape index: {}]
  %s3 = inlined_call_operand.hbm [shape: f32[32,96], index: 3, kind: input, shape index: {}]
  %s4 = inlined_call_operand.vmem [shape: f32[1,96], index: 4, kind: input, shape index: {}]
  %s5 = inlined_call_operand.hbm [shape: f32[32,32], index: 5, kind: input, shape index: {}]
  %s6 = inlined_call_operand.vmem [shape: f32[1,32], index: 6, kind: input, shape index: {}]
  %s7 = inlined_call_operand.hbm [shape: f32[16,32], index: 7, kind: output, shape index: {}]
  %s8 = sld [smem:[#allocation0]]
  $region50: #{tpu_custom_call.1} parent=0
    _
  %s10 = ssub.s32 1, %s8
  %s11 = scalar_select 0, %s10, %s8
  $region1: #{tpu_custom_call.1} parent=0
    #allocation2 [shape = 'u8[8192]{0}', space=vmem, size = 0x2000, scoped, tag = 'input window, operand 0, single buffered']
    #allocation3 [shape = 's32[1]{0}', space=sflag, size = 0x4, scoped, tag = 'scoped memory for tpu_custom_call.1']
    #allocation4 [shape = 's32[1]{0}', space=sflag, size = 0x4, scoped, tag = 'scoped memory for tpu_custom_call.1']
    #allocation5 [shape = 'u8[16384]{0}', space=vmem, size = 0x4000, scoped, tag = 'input window, operand 3, single buffered']
    #allocation6 [shape = 's32[1]{0}', space=sflag, size = 0x4, scoped, tag = 'scoped memory for tpu_custom_call.1']
    #allocation7 [shape = 'u8[16384]{0}', space=vmem, size = 0x4000, scoped, tag = 'input window, operand 5, single buffered']
    #allocation8 [shape = 'u8[8192]{0}', space=vmem, size = 0x2000, scoped, tag = 'output window, operand 0, single buffered']
    %12 = vsyncpa [#allocation3], 0
    %13 = vsyncpa [#allocation6], 0
    %14 = vsyncpa [#allocation4], 0
    // Predicated region
    $region2: #{tpu_custom_call.1} parent=1 // pred_check
      _
    $region3: #{tpu_custom_call.1} parent=1 // pred_check_branch
      %16 = sbr.rel (0) target = $region5
    $region4: #{tpu_custom_call.1} parent=1 // pred_region
      %s18 = ssub.s32 256, 256
      %19 = vsyncadd [#allocation3], %s18
      %s20 = sshll.u32 [#allocation2], 4
      %s21 = int_to_ptr.vmem [resolvable:$true] %s20
      %26 = dma.hbm_to_vmem [thread:$0]  %s0, 256, %s21, [#allocation3], 128, 128, 8
    $region5: #{tpu_custom_call.1} parent=1 // pred_fallthru
      _
    // Predicated region
    $region6: #{tpu_custom_call.1} parent=1 // pred_check
      _
    $region7: #{tpu_custom_call.1} parent=1 // pred_check_branch
      %28 = sbr.rel (0) target = $region9
    $region8: #{tpu_custom_call.1} parent=1 // pred_region
      _
    $region9: #{tpu_custom_call.1} parent=1 // pred_fallthru
      _
    // Predicated region
    $region10: #{tpu_custom_call.1} parent=1 // pred_check
      _
    $region11: #{tpu_custom_call.1} parent=1 // pred_check_branch
      %30 = sbr.rel (0) target = $region13
    $region12: #{tpu_custom_call.1} parent=1 // pred_region
      _
    $region13: #{tpu_custom_call.1} parent=1 // pred_fallthru
      _
    // Predicated region
    $region14: #{tpu_custom_call.1} parent=1 // pred_check
      _
    $region15: #{tpu_custom_call.1} parent=1 // pred_check_branch
      %32 = sbr.rel (0) target = $region17
    $region16: #{tpu_custom_call.1} parent=1 // pred_region
      %s34 = ssub.s32 512, 512
      %35 = vsyncadd [#allocation6], %s34
      %s36 = sshll.u32 [#allocation5], 4
      %s37 = int_to_ptr.vmem [resolvable:$true] %s36
      %42 = dma.hbm_to_vmem [thread:$0]  %s3, 512, %s37, [#allocation6], 128, 128, 8
    $region17: #{tpu_custom_call.1} parent=1 // pred_fallthru
      _
    // Predicated region
    $region18: #{tpu_custom_call.1} parent=1 // pred_check
      _
    $region19: #{tpu_custom_call.1} parent=1 // pred_check_branch
      %44 = sbr.rel (0) target = $region21
    $region20: #{tpu_custom_call.1} parent=1 // pred_region
      _
    $region21: #{tpu_custom_call.1} parent=1 // pred_fallthru
      _
    // Predicated region
    $region22: #{tpu_custom_call.1} parent=1 // pred_check
      _
    $region23: #{tpu_custom_call.1} parent=1 // pred_check_branch
      %46 = sbr.rel (0) target = $region25
    $region24: #{tpu_custom_call.1} parent=1 // pred_region
      %s48 = ssub.s32 512, 512
      %49 = vsyncadd [#allocation6], %s48
      %s50 = sshll.u32 [#allocation7], 4
      %s51 = int_to_ptr.vmem [resolvable:$true] %s50
      %56 = dma.hbm_to_vmem [thread:$0]  %s5, 512, %s51, [#allocation6], 128, 128, 8
    $region25: #{tpu_custom_call.1} parent=1 // pred_fallthru
      _
    // Predicated region
    $region26: #{tpu_custom_call.1} parent=1 // pred_check
      _
    $region27: #{tpu_custom_call.1} parent=1 // pred_check_branch
      %58 = sbr.rel (0) target = $region29
    $region28: #{tpu_custom_call.1} parent=1 // pred_region
      _
    $region29: #{tpu_custom_call.1} parent=1 // pred_fallthru
      _
    // Predicated region
    $region30: #{tpu_custom_call.1} parent=1 // pred_check
      _
    $region31: #{tpu_custom_call.1} parent=1 // pred_check_branch
      %60 = sbr.rel (0) target = $region33
    $region32: #{tpu_custom_call.1} parent=1 // pred_region
      %61 = dma.done [#allocation3], 256
    $region33: #{tpu_custom_call.1} parent=1 // pred_fallthru
      _
    // Predicated region
    $region34: #{tpu_custom_call.1} parent=1 // pred_check
      _
    $region35: #{tpu_custom_call.1} parent=1 // pred_check_branch
      %63 = sbr.rel (0) target = $region37
    $region36: #{tpu_custom_call.1} parent=1 // pred_region
      %64 = dma.done [#allocation6], 512
    $region37: #{tpu_custom_call.1} parent=1 // pred_fallthru
      _
    // Predicated region
    $region38: #{tpu_custom_call.1} parent=1 // pred_check
      _
    $region39: #{tpu_custom_call.1} parent=1 // pred_check_branch
      %66 = sbr.rel (0) target = $region41
    $region40: #{tpu_custom_call.1} parent=1 // pred_region
      %67 = dma.done [#allocation6], 512
    $region41: #{tpu_custom_call.1} parent=1 // pred_fallthru
      _
    %v69 = vld [vmem:[#allocation2] sm:$0xff]
    %v70 = vld [vmem:[#allocation2 + $0x8] sm:$0xff]
    %vm71 = vcmask 261120
    %v72 = vsel %vm71, %v69, 0.0
    %73 = vadd.xlane.f32.xlu0 %v72
    %v74 = vpop.xlane.xlu0 %73
    %v75 = vsel %vm71, %v70, 0.0
    %76 = vadd.xlane.f32.xlu0 %v75
    %v77 = vpop.xlane.xlu0 %76
    %v78 = vrcp.pop 32.0
    %v79 = vmul.f32 %v74, %v78
    %v80 = vmul.f32 %v77, %v78
    %v81 = vsub.f32 %v69, %v79
    %v82 = vsub.f32 %v70, %v80
    %v83 = vmul.f32 %v81, %v81
    %v84 = vmul.f32 %v82, %v82
    %v85 = vsel %vm71, %v83, 0.0
    %86 = vadd.xlane.f32.xlu0 %v85
    %v87 = vpop.xlane.xlu0 %86
    %v88 = vsel %vm71, %v84, 0.0
    %89 = vadd.xlane.f32.xlu0 %v88
    %v90 = vpop.xlane.xlu0 %89
    %v91 = vmul.f32 %v87, %v78
    %v92 = vmul.f32 %v90, %v78
    %v93 = vadd.f32 %v91, 1e-05
    %v94 = vadd.f32 %v92, 1e-05
    %v95 = vrsqrt.pop %v93
    %v96 = vrsqrt.pop %v94
    %v97 = vmul.f32 %v81, %v95
    %v98 = vmul.f32 %v82, %v96
    %v99 = vld [vmem:[%s1] sm:$0x1]
    %v101 = vlaneseq
    %v102 = vshrl.u32 %v101, 7
    %v103 = vsub.s32 0, %v102
    %v104 = vrot.slane %v99, %v103
    %v106 = vmul.f32 %v97, %v104
    %v107 = vmul.f32 %v98, %v104
    %v108 = vld [vmem:[%s2] sm:$0x1]
    %v110 = vlaneseq
    %v111 = vshrl.u32 %v110, 7
    %v112 = vsub.s32 0, %v111
    %v113 = vrot.slane %v108, %v112
    %v115 = vadd.f32 %v106, %v113
    %v116 = vadd.f32 %v107, %v113
    %v117 = vpack.c.bf16 %v116, %v115
    %v118 = vld [vmem:[#allocation5] sm:$0xff]
    %v119 = vld [vmem:[#allocation5 + $0x8] sm:$0xff]
    %v120 = vld [vmem:[#allocation5 + $0x10] sm:$0xff]
    %v121 = vld [vmem:[#allocation5 + $0x18] sm:$0xff]
    %v122 = vpack.c.bf16 %v119, %v118
    %v123 = vpack.c.bf16 %v121, %v120
    %v124 = vld [vmem:[%s4] sm:$0x1]
    %v126 = vlaneseq
    %v127 = vshrl.u32 %v126, 7
    %v128 = vsub.s32 0, %v127
    %v129 = vrot.slane %v124, %v128
    %v132 = vsel %vm71, %v117, 0
    %134 = vmatprep.subr.bf16.mxu0 0
    %135 = vmatpush1.bf16.msra.mxu0 %v122
    %136 = vmatprep.subr.bf16.mxu0 0
    %137 = vmatpush1.bf16.msra.mxu0 %v123
    %138 = vmatprep.subr.bf16.mxu0 0
    %139 = vmatpush1.bf16.msra.mxu0 0
    %140 = vmatprep.subr.bf16.mxu0 0
    %141 = vmatpush1.bf16.msra.mxu0 0
    %142 = vmatprep.subr.bf16.mxu0 0
    %143 = vmatpush1.bf16.msra.mxu0 0
    %144 = vmatprep.subr.bf16.mxu0 0
    %145 = vmatpush1.bf16.msra.mxu0 0
    %146 = vmatprep.subr.bf16.mxu0 0
    %147 = vmatpush1.bf16.msra.mxu0 0
    %148 = vmatprep.subr.bf16.mxu0 0
    %149 = vmatpush1.bf16.msra.mxu0 0
    %150 = vmatprep.subr.bf16.mxu0 0
    %151 = vmatpush1.bf16.msra.mxu0 0
    %152 = vmatprep.subr.bf16.mxu0 0
    %153 = vmatpush1.bf16.msra.mxu0 0
    %154 = vmatprep.subr.bf16.mxu0 0
    %155 = vmatpush1.bf16.msra.mxu0 0
    %156 = vmatprep.subr.bf16.mxu0 0
    %157 = vmatpush1.bf16.msra.mxu0 0
    %158 = vmatprep.subr.bf16.mxu0 0
    %159 = vmatpush1.bf16.msra.mxu0 0
    %160 = vmatprep.subr.bf16.mxu0 0
    %161 = vmatpush1.bf16.msra.mxu0 0
    %162 = vmatprep.subr.bf16.mxu0 0
    %163 = vmatpush1.bf16.msra.mxu0 0
    %164 = vmatprep.subr.bf16.mxu0 0
    %165 = vmatpush1.bf16.msra.mxu0 0
    %166 = vmatprep.mubr.bf16.mxu0 0
    %167 = vmatmul.mubr.bf16.gmra.mrb[0].mxu0 %v132
    %v168 = vpop.f32.mrb[0].mxu0
    %v169 = vadd.f32 %v129, %v168
    %v170 = vpop.f32.mrb[0].mxu0
    %v171 = vpop.f32.mrb[0].mxu0
    %v172 = vadd.f32 %v129, %v171
    %v173 = vpop.f32.mrb[0].mxu0
    %174 = vdwg.mxu0
    %v175 = vmul.f32 %v169, 0.35355338
    %v176 = vmul.f32 %v172, 0.35355338
    %178 = vrot.lane.b32.xlu0 %v169, 96
    %v179 = vpop.permute.xlu0 %178
    %vm180 = vcmask 64512
    %v182 = vsel %vm180, %v175, 0
    %v184 = vsel %vm180, %v179, 0
    %186 = vmatprep.subr.mxu0 0.0
    %187 = vmatpush1.xpose.msra.mxu0 %v184
    %188 = vmatprep.subr.mxu0 0.0
    %189 = vmatpush1.xpose.msra.mxu0 0.0
    %190 = vmatprep.subr.mxu0 0.0
    %191 = vmatpush1.xpose.msra.mxu0 0.0
    %192 = vmatprep.subr.mxu0 0.0
    %193 = vmatpush1.xpose.msra.mxu0 0.0
    %194 = vmatprep.subr.mxu0 0.0
    %195 = vmatpush1.xpose.msra.mxu0 0.0
    %196 = vmatprep.subr.mxu0 0.0
    %197 = vmatpush1.xpose.msra.mxu0 0.0
    %198 = vmatprep.subr.mxu0 0.0
    %199 = vmatpush1.xpose.msra.mxu0 0.0
    %200 = vmatprep.subr.mxu0 0.0
    %201 = vmatpush1.xpose.msra.mxu0 0.0
    %202 = vmatprep.subr.mxu0 0.0
    %203 = vmatpush1.xpose.msra.mxu0 0.0
    %204 = vmatprep.subr.mxu0 0.0
    %205 = vmatpush1.xpose.msra.mxu0 0.0
    %206 = vmatprep.subr.mxu0 0.0
    %207 = vmatpush1.xpose.msra.mxu0 0.0
    %208 = vmatprep.subr.mxu0 0.0
    %209 = vmatpush1.xpose.msra.mxu0 0.0
    %210 = vmatprep.subr.mxu0 0.0
    %211 = vmatpush1.xpose.msra.mxu0 0.0
    %212 = vmatprep.subr.mxu0 0.0
    %213 = vmatpush1.xpose.msra.mxu0 0.0
    %214 = vmatprep.subr.mxu0 0.0
    %215 = vmatpush1.xpose.msra.mxu0 0.0
    %216 = vmatprep.subr.mxu0 0.0
    %217 = vmatpush1.xpose.msra.mxu0 0.0
    %218 = vmatprep.subr.mxu0 0.0
    %219 = vmatpush1.xpose.msra.mxu0 0.0
    %220 = vmatprep.subr.mxu0 0.0
    %221 = vmatpush1.xpose.msra.mxu0 0.0
    %222 = vmatprep.subr.mxu0 0.0
    %223 = vmatpush1.xpose.msra.mxu0 0.0
    %224 = vmatprep.subr.mxu0 0.0
    %225 = vmatpush1.xpose.msra.mxu0 0.0
    %226 = vmatprep.subr.mxu0 0.0
    %227 = vmatpush1.xpose.msra.mxu0 0.0
    %228 = vmatprep.subr.mxu0 0.0
    %229 = vmatpush1.xpose.msra.mxu0 0.0
    %230 = vmatprep.subr.mxu0 0.0
    %231 = vmatpush1.xpose.msra.mxu0 0.0
    %232 = vmatprep.subr.mxu0 0.0
    %233 = vmatpush1.xpose.msra.mxu0 0.0
    %234 = vmatprep.subr.mxu0 0.0
    %235 = vmatpush1.xpose.msra.mxu0 0.0
    %236 = vmatprep.subr.mxu0 0.0
    %237 = vmatpush1.xpose.msra.mxu0 0.0
    %238 = vmatprep.subr.mxu0 0.0
    %239 = vmatpush1.xpose.msra.mxu0 0.0
    %240 = vmatprep.subr.mxu0 0.0
    %241 = vmatpush1.xpose.msra.mxu0 0.0
    %242 = vmatprep.subr.mxu0 0.0
    %243 = vmatpush1.xpose.msra.mxu0 0.0
    %244 = vmatprep.subr.mxu0 0.0
    %245 = vmatpush1.xpose.msra.mxu0 0.0
    %246 = vmatprep.subr.mxu0 0.0
    %247 = vmatpush1.xpose.msra.mxu0 0.0
    %248 = vmatprep.subr.mxu0 0.0
    %249 = vmatpush1.xpose.msra.mxu0 0.0
    %250 = vmatprep.mubr.f32.mxu0 0.0
    %251 = vmatmul.mubr.f32.gmra.mrb[0].mxu0 %v182
    %v252 = vpop.f32.mrb[0].mxu0
    %v253 = vadd.f32 0.0, %v252
    %v254 = vpop.f32.mrb[0].mxu0
    %255 = vdwg.mxu0
    %257 = vrot.lane.b32.xlu0 %v172, 96
    %v258 = vpop.permute.xlu0 %257
    %v260 = vsel %vm180, %v176, 0
    %v262 = vsel %vm180, %v258, 0
    %264 = vmatprep.subr.mxu0 0.0
    %265 = vmatpush1.xpose.msra.mxu0 %v262
    %266 = vmatprep.subr.mxu0 0.0
    %267 = vmatpush1.xpose.msra.mxu0 0.0
    %268 = vmatprep.subr.mxu0 0.0
    %269 = vmatpush1.xpose.msra.mxu0 0.0
    %270 = vmatprep.subr.mxu0 0.0
    %271 = vmatpush1.xpose.msra.mxu0 0.0
    %272 = vmatprep.subr.mxu0 0.0
    %273 = vmatpush1.xpose.msra.mxu0 0.0
    %274 = vmatprep.subr.mxu0 0.0
    %275 = vmatpush1.xpose.msra.mxu0 0.0
    %276 = vmatprep.subr.mxu0 0.0
    %277 = vmatpush1.xpose.msra.mxu0 0.0
    %278 = vmatprep.subr.mxu0 0.0
    %279 = vmatpush1.xpose.msra.mxu0 0.0
    %280 = vmatprep.subr.mxu0 0.0
    %281 = vmatpush1.xpose.msra.mxu0 0.0
    %282 = vmatprep.subr.mxu0 0.0
    %283 = vmatpush1.xpose.msra.mxu0 0.0
    %284 = vmatprep.subr.mxu0 0.0
    %285 = vmatpush1.xpose.msra.mxu0 0.0
    %286 = vmatprep.subr.mxu0 0.0
    %287 = vmatpush1.xpose.msra.mxu0 0.0
    %288 = vmatprep.subr.mxu0 0.0
    %289 = vmatpush1.xpose.msra.mxu0 0.0
    %290 = vmatprep.subr.mxu0 0.0
    %291 = vmatpush1.xpose.msra.mxu0 0.0
    %292 = vmatprep.subr.mxu0 0.0
    %293 = vmatpush1.xpose.msra.mxu0 0.0
    %294 = vmatprep.subr.mxu0 0.0
    %295 = vmatpush1.xpose.msra.mxu0 0.0
    %296 = vmatprep.subr.mxu0 0.0
    %297 = vmatpush1.xpose.msra.mxu0 0.0
    %298 = vmatprep.subr.mxu0 0.0
    %299 = vmatpush1.xpose.msra.mxu0 0.0
    %300 = vmatprep.subr.mxu0 0.0
    %301 = vmatpush1.xpose.msra.mxu0 0.0
    %302 = vmatprep.subr.mxu0 0.0
    %303 = vmatpush1.xpose.msra.mxu0 0.0
    %304 = vmatprep.subr.mxu0 0.0
    %305 = vmatpush1.xpose.msra.mxu0 0.0
    %306 = vmatprep.subr.mxu0 0.0
    %307 = vmatpush1.xpose.msra.mxu0 0.0
    %308 = vmatprep.subr.mxu0 0.0
    %309 = vmatpush1.xpose.msra.mxu0 0.0
    %310 = vmatprep.subr.mxu0 0.0
    %311 = vmatpush1.xpose.msra.mxu0 0.0
    %312 = vmatprep.subr.mxu0 0.0
    %313 = vmatpush1.xpose.msra.mxu0 0.0
    %314 = vmatprep.subr.mxu0 0.0
    %315 = vmatpush1.xpose.msra.mxu0 0.0
    %316 = vmatprep.subr.mxu0 0.0
    %317 = vmatpush1.xpose.msra.mxu0 0.0
    %318 = vmatprep.subr.mxu0 0.0
    %319 = vmatpush1.xpose.msra.mxu0 0.0
    %320 = vmatprep.subr.mxu0 0.0
    %321 = vmatpush1.xpose.msra.mxu0 0.0
    %322 = vmatprep.subr.mxu0 0.0
    %323 = vmatpush1.xpose.msra.mxu0 0.0
    %324 = vmatprep.subr.mxu0 0.0
    %325 = vmatpush1.xpose.msra.mxu0 0.0
    %326 = vmatprep.subr.mxu0 0.0
    %327 = vmatpush1.xpose.msra.mxu0 0.0
    %328 = vmatprep.mubr.f32.mxu0 0.0
    %329 = vmatmul.mubr.f32.gmra.mrb[0].mxu0 %v260
    %v330 = vpop.f32.mrb[0].mxu0
    %v331 = vadd.f32 0.0, %v330
    %v332 = vpop.f32.mrb[0].mxu0
    %333 = vdwg.mxu0
    %v334 = vsel %vm180, %v253, -inf
    %335 = vmax.xlane.f32.xlu0 %v334
    %v336 = vpop.xlane.xlu0 %335
    %v337 = vsel %vm180, %v331, -inf
    %338 = vmax.xlane.f32.xlu0 %v337
    %v339 = vpop.xlane.xlu0 %338
    %v340 = vsub.f32 %v253, %v336
    %v341 = vsub.f32 %v331, %v339
    %v342 = vmul.f32 %v340, 1.442695
    %v343 = vpow.pop %v342
    %v344 = vmul.f32 %v341, 1.442695
    %v345 = vpow.pop %v344
    %v346 = vsel %vm180, %v343, 0.0
    %347 = vadd.xlane.f32.xlu0 %v346
    %v348 = vpop.xlane.xlu0 %347
    %v349 = vsel %vm180, %v345, 0.0
    %350 = vadd.xlane.f32.xlu0 %v349
    %v351 = vpop.xlane.xlu0 %350
    %v352 = vrcp.pop %v348
    %v353 = vrcp.pop %v351
    %v354 = vmul.f32 %v343, %v352
    %v355 = vmul.f32 %v345, %v353
    %356 = vrot.lane.b32.xlu0 %v169, 64
    %v357 = vpop.permute.xlu0 %356
    %v360 = vsel %vm180, %v354, 0
    %362 = vmatprep.subr.mxu0 0.0
    %363 = vmatpush1.msra.mxu0 %v357
    %364 = vmatprep.subr.mxu0 0.0
    %365 = vmatpush1.msra.mxu0 0.0
    %366 = vmatprep.subr.mxu0 0.0
    %367 = vmatpush1.msra.mxu0 0.0
    %368 = vmatprep.subr.mxu0 0.0
    %369 = vmatpush1.msra.mxu0 0.0
    %370 = vmatprep.subr.mxu0 0.0
    %371 = vmatpush1.msra.mxu0 0.0
    %372 = vmatprep.subr.mxu0 0.0
    %373 = vmatpush1.msra.mxu0 0.0
    %374 = vmatprep.subr.mxu0 0.0
    %375 = vmatpush1.msra.mxu0 0.0
    %376 = vmatprep.subr.mxu0 0.0
    %377 = vmatpush1.msra.mxu0 0.0
    %378 = vmatprep.subr.mxu0 0.0
    %379 = vmatpush1.msra.mxu0 0.0
    %380 = vmatprep.subr.mxu0 0.0
    %381 = vmatpush1.msra.mxu0 0.0
    %382 = vmatprep.subr.mxu0 0.0
    %383 = vmatpush1.msra.mxu0 0.0
    %384 = vmatprep.subr.mxu0 0.0
    %385 = vmatpush1.msra.mxu0 0.0
    %386 = vmatprep.subr.mxu0 0.0
    %387 = vmatpush1.msra.mxu0 0.0
    %388 = vmatprep.subr.mxu0 0.0
    %389 = vmatpush1.msra.mxu0 0.0
    %390 = vmatprep.subr.mxu0 0.0
    %391 = vmatpush1.msra.mxu0 0.0
    %392 = vmatprep.subr.mxu0 0.0
    %393 = vmatpush1.msra.mxu0 0.0
    %394 = vmatprep.subr.mxu0 0.0
    %395 = vmatpush1.msra.mxu0 0.0
    %396 = vmatprep.subr.mxu0 0.0
    %397 = vmatpush1.msra.mxu0 0.0
    %398 = vmatprep.subr.mxu0 0.0
    %399 = vmatpush1.msra.mxu0 0.0
    %400 = vmatprep.subr.mxu0 0.0
    %401 = vmatpush1.msra.mxu0 0.0
    %402 = vmatprep.subr.mxu0 0.0
    %403 = vmatpush1.msra.mxu0 0.0
    %404 = vmatprep.subr.mxu0 0.0
    %405 = vmatpush1.msra.mxu0 0.0
    %406 = vmatprep.subr.mxu0 0.0
    %407 = vmatpush1.msra.mxu0 0.0
    %408 = vmatprep.subr.mxu0 0.0
    %409 = vmatpush1.msra.mxu0 0.0
    %410 = vmatprep.subr.mxu0 0.0
    %411 = vmatpush1.msra.mxu0 0.0
    %412 = vmatprep.subr.mxu0 0.0
    %413 = vmatpush1.msra.mxu0 0.0
    %414 = vmatprep.subr.mxu0 0.0
    %415 = vmatpush1.msra.mxu0 0.0
    %416 = vmatprep.subr.mxu0 0.0
    %417 = vmatpush1.msra.mxu0 0.0
    %418 = vmatprep.subr.mxu0 0.0
    %419 = vmatpush1.msra.mxu0 0.0
    %420 = vmatprep.subr.mxu0 0.0
    %421 = vmatpush1.msra.mxu0 0.0
    %422 = vmatprep.subr.mxu0 0.0
    %423 = vmatpush1.msra.mxu0 0.0
    %424 = vmatprep.subr.mxu0 0.0
    %425 = vmatpush1.msra.mxu0 0.0
    %426 = vmatprep.mubr.f32.mxu0 0.0
    %427 = vmatmul.mubr.f32.gmra.mrb[0].mxu0 %v360
    %v428 = vpop.f32.mrb[0].mxu0
    %v429 = vadd.f32 0.0, %v428
    %v430 = vpop.f32.mrb[0].mxu0
    %431 = vdwg.mxu0
    %432 = vrot.lane.b32.xlu0 %v172, 64
    %v433 = vpop.permute.xlu0 %432
    %v436 = vsel %vm180, %v355, 0
    %438 = vmatprep.subr.mxu0 0.0
    %439 = vmatpush1.msra.mxu0 %v433
    %440 = vmatprep.subr.mxu0 0.0
    %441 = vmatpush1.msra.mxu0 0.0
    %442 = vmatprep.subr.mxu0 0.0
    %443 = vmatpush1.msra.mxu0 0.0
    %444 = vmatprep.subr.mxu0 0.0
    %445 = vmatpush1.msra.mxu0 0.0
    %446 = vmatprep.subr.mxu0 0.0
    %447 = vmatpush1.msra.mxu0 0.0
    %448 = vmatprep.subr.mxu0 0.0
    %449 = vmatpush1.msra.mxu0 0.0
    %450 = vmatprep.subr.mxu0 0.0
    %451 = vmatpush1.msra.mxu0 0.0
    %452 = vmatprep.subr.mxu0 0.0
    %453 = vmatpush1.msra.mxu0 0.0
    %454 = vmatprep.subr.mxu0 0.0
    %455 = vmatpush1.msra.mxu0 0.0
    %456 = vmatprep.subr.mxu0 0.0
    %457 = vmatpush1.msra.mxu0 0.0
    %458 = vmatprep.subr.mxu0 0.0
    %459 = vmatpush1.msra.mxu0 0.0
    %460 = vmatprep.subr.mxu0 0.0
    %461 = vmatpush1.msra.mxu0 0.0
    %462 = vmatprep.subr.mxu0 0.0
    %463 = vmatpush1.msra.mxu0 0.0
    %464 = vmatprep.subr.mxu0 0.0
    %465 = vmatpush1.msra.mxu0 0.0
    %466 = vmatprep.subr.mxu0 0.0
    %467 = vmatpush1.msra.mxu0 0.0
    %468 = vmatprep.subr.mxu0 0.0
    %469 = vmatpush1.msra.mxu0 0.0
    %470 = vmatprep.subr.mxu0 0.0
    %471 = vmatpush1.msra.mxu0 0.0
    %472 = vmatprep.subr.mxu0 0.0
    %473 = vmatpush1.msra.mxu0 0.0
    %474 = vmatprep.subr.mxu0 0.0
    %475 = vmatpush1.msra.mxu0 0.0
    %476 = vmatprep.subr.mxu0 0.0
    %477 = vmatpush1.msra.mxu0 0.0
    %478 = vmatprep.subr.mxu0 0.0
    %479 = vmatpush1.msra.mxu0 0.0
    %480 = vmatprep.subr.mxu0 0.0
    %481 = vmatpush1.msra.mxu0 0.0
    %482 = vmatprep.subr.mxu0 0.0
    %483 = vmatpush1.msra.mxu0 0.0
    %484 = vmatprep.subr.mxu0 0.0
    %485 = vmatpush1.msra.mxu0 0.0
    %486 = vmatprep.subr.mxu0 0.0
    %487 = vmatpush1.msra.mxu0 0.0
    %488 = vmatprep.subr.mxu0 0.0
    %489 = vmatpush1.msra.mxu0 0.0
    %490 = vmatprep.subr.mxu0 0.0
    %491 = vmatpush1.msra.mxu0 0.0
    %492 = vmatprep.subr.mxu0 0.0
    %493 = vmatpush1.msra.mxu0 0.0
    %494 = vmatprep.subr.mxu0 0.0
    %495 = vmatpush1.msra.mxu0 0.0
    %496 = vmatprep.subr.mxu0 0.0
    %497 = vmatpush1.msra.mxu0 0.0
    %498 = vmatprep.subr.mxu0 0.0
    %499 = vmatpush1.msra.mxu0 0.0
    %500 = vmatprep.subr.mxu0 0.0
    %501 = vmatpush1.msra.mxu0 0.0
    %502 = vmatprep.mubr.f32.mxu0 0.0
    %503 = vmatmul.mubr.f32.gmra.mrb[0].mxu0 %v436
    %v504 = vpop.f32.mrb[0].mxu0
    %v505 = vadd.f32 0.0, %v504
    %v506 = vpop.f32.mrb[0].mxu0
    %507 = vdwg.mxu0
    %508 = vrot.lane.b32.xlu0 %v175, 120
    %v509 = vpop.permute.xlu0 %508
    %510 = vrot.lane.b32.xlu0 %v169, 88
    %v511 = vpop.permute.xlu0 %510
    %v512 = vsel %vm180, %v509, 0
    %v514 = vsel %vm180, %v511, 0
    %516 = vmatprep.subr.mxu0 0.0
    %517 = vmatpush1.xpose.msra.mxu0 %v514
    %518 = vmatprep.subr.mxu0 0.0
    %519 = vmatpush1.xpose.msra.mxu0 0.0
    %520 = vmatprep.subr.mxu0 0.0
    %521 = vmatpush1.xpose.msra.mxu0 0.0
    %522 = vmatprep.subr.mxu0 0.0
    %523 = vmatpush1.xpose.msra.mxu0 0.0
    %524 = vmatprep.subr.mxu0 0.0
    %525 = vmatpush1.xpose.msra.mxu0 0.0
    %526 = vmatprep.subr.mxu0 0.0
    %527 = vmatpush1.xpose.msra.mxu0 0.0
    %528 = vmatprep.subr.mxu0 0.0
    %529 = vmatpush1.xpose.msra.mxu0 0.0
    %530 = vmatprep.subr.mxu0 0.0
    %531 = vmatpush1.xpose.msra.mxu0 0.0
    %532 = vmatprep.subr.mxu0 0.0
    %533 = vmatpush1.xpose.msra.mxu0 0.0
    %534 = vmatprep.subr.mxu0 0.0
    %535 = vmatpush1.xpose.msra.mxu0 0.0
    %536 = vmatprep.subr.mxu0 0.0
    %537 = vmatpush1.xpose.msra.mxu0 0.0
    %538 = vmatprep.subr.mxu0 0.0
    %539 = vmatpush1.xpose.msra.mxu0 0.0
    %540 = vmatprep.subr.mxu0 0.0
    %541 = vmatpush1.xpose.msra.mxu0 0.0
    %542 = vmatprep.subr.mxu0 0.0
    %543 = vmatpush1.xpose.msra.mxu0 0.0
    %544 = vmatprep.subr.mxu0 0.0
    %545 = vmatpush1.xpose.msra.mxu0 0.0
    %546 = vmatprep.subr.mxu0 0.0
    %547 = vmatpush1.xpose.msra.mxu0 0.0
    %548 = vmatprep.subr.mxu0 0.0
    %549 = vmatpush1.xpose.msra.mxu0 0.0
    %550 = vmatprep.subr.mxu0 0.0
    %551 = vmatpush1.xpose.msra.mxu0 0.0
    %552 = vmatprep.subr.mxu0 0.0
    %553 = vmatpush1.xpose.msra.mxu0 0.0
    %554 = vmatprep.subr.mxu0 0.0
    %555 = vmatpush1.xpose.msra.mxu0 0.0
    %556 = vmatprep.subr.mxu0 0.0
    %557 = vmatpush1.xpose.msra.mxu0 0.0
    %558 = vmatprep.subr.mxu0 0.0
    %559 = vmatpush1.xpose.msra.mxu0 0.0
    %560 = vmatprep.subr.mxu0 0.0
    %561 = vmatpush1.xpose.msra.mxu0 0.0
    %562 = vmatprep.subr.mxu0 0.0
    %563 = vmatpush1.xpose.msra.mxu0 0.0
    %564 = vmatprep.subr.mxu0 0.0
    %565 = vmatpush1.xpose.msra.mxu0 0.0
    %566 = vmatprep.subr.mxu0 0.0
    %567 = vmatpush1.xpose.msra.mxu0 0.0
    %568 = vmatprep.subr.mxu0 0.0
    %569 = vmatpush1.xpose.msra.mxu0 0.0
    %570 = vmatprep.subr.mxu0 0.0
    %571 = vmatpush1.xpose.msra.mxu0 0.0
    %572 = vmatprep.subr.mxu0 0.0
    %573 = vmatpush1.xpose.msra.mxu0 0.0
    %574 = vmatprep.subr.mxu0 0.0
    %575 = vmatpush1.xpose.msra.mxu0 0.0
    %576 = vmatprep.subr.mxu0 0.0
    %577 = vmatpush1.xpose.msra.mxu0 0.0
    %578 = vmatprep.subr.mxu0 0.0
    %579 = vmatpush1.xpose.msra.mxu0 0.0
    %580 = vmatprep.mubr.f32.mxu0 0.0
    %581 = vmatmul.mubr.f32.gmra.mrb[0].mxu0 %v512
    %v582 = vpop.f32.mrb[0].mxu0
    %v583 = vadd.f32 0.0, %v582
    %v584 = vpop.f32.mrb[0].mxu0
    %585 = vdwg.mxu0
    %586 = vrot.lane.b32.xlu0 %v176, 120
    %v587 = vpop.permute.xlu0 %586
    %588 = vrot.lane.b32.xlu0 %v172, 88
    %v589 = vpop.permute.xlu0 %588
    %v590 = vsel %vm180, %v587, 0
    %v592 = vsel %vm180, %v589, 0
    %594 = vmatprep.subr.mxu0 0.0
    %595 = vmatpush1.xpose.msra.mxu0 %v592
    %596 = vmatprep.subr.mxu0 0.0
    %597 = vmatpush1.xpose.msra.mxu0 0.0
    %598 = vmatprep.subr.mxu0 0.0
    %599 = vmatpush1.xpose.msra.mxu0 0.0
    %600 = vmatprep.subr.mxu0 0.0
    %601 = vmatpush1.xpose.msra.mxu0 0.0
    %602 = vmatprep.subr.mxu0 0.0
    %603 = vmatpush1.xpose.msra.mxu0 0.0
    %604 = vmatprep.subr.mxu0 0.0
    %605 = vmatpush1.xpose.msra.mxu0 0.0
    %606 = vmatprep.subr.mxu0 0.0
    %607 = vmatpush1.xpose.msra.mxu0 0.0
    %608 = vmatprep.subr.mxu0 0.0
    %609 = vmatpush1.xpose.msra.mxu0 0.0
    %610 = vmatprep.subr.mxu0 0.0
    %611 = vmatpush1.xpose.msra.mxu0 0.0
    %612 = vmatprep.subr.mxu0 0.0
    %613 = vmatpush1.xpose.msra.mxu0 0.0
    %614 = vmatprep.subr.mxu0 0.0
    %615 = vmatpush1.xpose.msra.mxu0 0.0
    %616 = vmatprep.subr.mxu0 0.0
    %617 = vmatpush1.xpose.msra.mxu0 0.0
    %618 = vmatprep.subr.mxu0 0.0
    %619 = vmatpush1.xpose.msra.mxu0 0.0
    %620 = vmatprep.subr.mxu0 0.0
    %621 = vmatpush1.xpose.msra.mxu0 0.0
    %622 = vmatprep.subr.mxu0 0.0
    %623 = vmatpush1.xpose.msra.mxu0 0.0
    %624 = vmatprep.subr.mxu0 0.0
    %625 = vmatpush1.xpose.msra.mxu0 0.0
    %626 = vmatprep.subr.mxu0 0.0
    %627 = vmatpush1.xpose.msra.mxu0 0.0
    %628 = vmatprep.subr.mxu0 0.0
    %629 = vmatpush1.xpose.msra.mxu0 0.0
    %630 = vmatprep.subr.mxu0 0.0
    %631 = vmatpush1.xpose.msra.mxu0 0.0
    %632 = vmatprep.subr.mxu0 0.0
    %633 = vmatpush1.xpose.msra.mxu0 0.0
    %634 = vmatprep.subr.mxu0 0.0
    %635 = vmatpush1.xpose.msra.mxu0 0.0
    %636 = vmatprep.subr.mxu0 0.0
    %637 = vmatpush1.xpose.msra.mxu0 0.0
    %638 = vmatprep.subr.mxu0 0.0
    %639 = vmatpush1.xpose.msra.mxu0 0.0
    %640 = vmatprep.subr.mxu0 0.0
    %641 = vmatpush1.xpose.msra.mxu0 0.0
    %642 = vmatprep.subr.mxu0 0.0
    %643 = vmatpush1.xpose.msra.mxu0 0.0
    %644 = vmatprep.subr.mxu0 0.0
    %645 = vmatpush1.xpose.msra.mxu0 0.0
    %646 = vmatprep.subr.mxu0 0.0
    %647 = vmatpush1.xpose.msra.mxu0 0.0
    %648 = vmatprep.subr.mxu0 0.0
    %649 = vmatpush1.xpose.msra.mxu0 0.0
    %650 = vmatprep.subr.mxu0 0.0
    %651 = vmatpush1.xpose.msra.mxu0 0.0
    %652 = vmatprep.subr.mxu0 0.0
    %653 = vmatpush1.xpose.msra.mxu0 0.0
    %654 = vmatprep.subr.mxu0 0.0
    %655 = vmatpush1.xpose.msra.mxu0 0.0
    %656 = vmatprep.subr.mxu0 0.0
    %657 = vmatpush1.xpose.msra.mxu0 0.0
    %658 = vmatprep.mubr.f32.mxu0 0.0
    %659 = vmatmul.mubr.f32.gmra.mrb[0].mxu0 %v590
    %v660 = vpop.f32.mrb[0].mxu0
    %v661 = vadd.f32 0.0, %v660
    %v662 = vpop.f32.mrb[0].mxu0
    %663 = vdwg.mxu0
    %v664 = vsel %vm180, %v583, -inf
    %665 = vmax.xlane.f32.xlu0 %v664
    %v666 = vpop.xlane.xlu0 %665
    %v667 = vsel %vm180, %v661, -inf
    %668 = vmax.xlane.f32.xlu0 %v667
    %v669 = vpop.xlane.xlu0 %668
    %v670 = vsub.f32 %v583, %v666
    %v671 = vsub.f32 %v661, %v669
    %v672 = vmul.f32 %v670, 1.442695
    %v673 = vpow.pop %v672
    %v674 = vmul.f32 %v671, 1.442695
    %v675 = vpow.pop %v674
    %v676 = vsel %vm180, %v673, 0.0
    %677 = vadd.xlane.f32.xlu0 %v676
    %v678 = vpop.xlane.xlu0 %677
    %v679 = vsel %vm180, %v675, 0.0
    %680 = vadd.xlane.f32.xlu0 %v679
    %v681 = vpop.xlane.xlu0 %680
    %v682 = vrcp.pop %v678
    %v683 = vrcp.pop %v681
    %v684 = vmul.f32 %v673, %v682
    %v685 = vmul.f32 %v675, %v683
    %686 = vrot.lane.b32.xlu0 %v169, 56
    %v687 = vpop.permute.xlu0 %686
    %v690 = vsel %vm180, %v684, 0
    %692 = vmatprep.subr.mxu0 0.0
    %693 = vmatpush1.msra.mxu0 %v687
    %694 = vmatprep.subr.mxu0 0.0
    %695 = vmatpush1.msra.mxu0 0.0
    %696 = vmatprep.subr.mxu0 0.0
    %697 = vmatpush1.msra.mxu0 0.0
    %698 = vmatprep.subr.mxu0 0.0
    %699 = vmatpush1.msra.mxu0 0.0
    %700 = vmatprep.subr.mxu0 0.0
    %701 = vmatpush1.msra.mxu0 0.0
    %702 = vmatprep.subr.mxu0 0.0
    %703 = vmatpush1.msra.mxu0 0.0
    %704 = vmatprep.subr.mxu0 0.0
    %705 = vmatpush1.msra.mxu0 0.0
    %706 = vmatprep.subr.mxu0 0.0
    %707 = vmatpush1.msra.mxu0 0.0
    %708 = vmatprep.subr.mxu0 0.0
    %709 = vmatpush1.msra.mxu0 0.0
    %710 = vmatprep.subr.mxu0 0.0
    %711 = vmatpush1.msra.mxu0 0.0
    %712 = vmatprep.subr.mxu0 0.0
    %713 = vmatpush1.msra.mxu0 0.0
    %714 = vmatprep.subr.mxu0 0.0
    %715 = vmatpush1.msra.mxu0 0.0
    %716 = vmatprep.subr.mxu0 0.0
    %717 = vmatpush1.msra.mxu0 0.0
    %718 = vmatprep.subr.mxu0 0.0
    %719 = vmatpush1.msra.mxu0 0.0
    %720 = vmatprep.subr.mxu0 0.0
    %721 = vmatpush1.msra.mxu0 0.0
    %722 = vmatprep.subr.mxu0 0.0
    %723 = vmatpush1.msra.mxu0 0.0
    %724 = vmatprep.subr.mxu0 0.0
    %725 = vmatpush1.msra.mxu0 0.0
    %726 = vmatprep.subr.mxu0 0.0
    %727 = vmatpush1.msra.mxu0 0.0
    %728 = vmatprep.subr.mxu0 0.0
    %729 = vmatpush1.msra.mxu0 0.0
    %730 = vmatprep.subr.mxu0 0.0
    %731 = vmatpush1.msra.mxu0 0.0
    %732 = vmatprep.subr.mxu0 0.0
    %733 = vmatpush1.msra.mxu0 0.0
    %734 = vmatprep.subr.mxu0 0.0
    %735 = vmatpush1.msra.mxu0 0.0
    %736 = vmatprep.subr.mxu0 0.0
    %737 = vmatpush1.msra.mxu0 0.0
    %738 = vmatprep.subr.mxu0 0.0
    %739 = vmatpush1.msra.mxu0 0.0
    %740 = vmatprep.subr.mxu0 0.0
    %741 = vmatpush1.msra.mxu0 0.0
    %742 = vmatprep.subr.mxu0 0.0
    %743 = vmatpush1.msra.mxu0 0.0
    %744 = vmatprep.subr.mxu0 0.0
    %745 = vmatpush1.msra.mxu0 0.0
    %746 = vmatprep.subr.mxu0 0.0
    %747 = vmatpush1.msra.mxu0 0.0
    %748 = vmatprep.subr.mxu0 0.0
    %749 = vmatpush1.msra.mxu0 0.0
    %750 = vmatprep.subr.mxu0 0.0
    %751 = vmatpush1.msra.mxu0 0.0
    %752 = vmatprep.subr.mxu0 0.0
    %753 = vmatpush1.msra.mxu0 0.0
    %754 = vmatprep.subr.mxu0 0.0
    %755 = vmatpush1.msra.mxu0 0.0
    %756 = vmatprep.mubr.f32.mxu0 0.0
    %757 = vmatmul.mubr.f32.gmra.mrb[0].mxu0 %v690
    %v758 = vpop.f32.mrb[0].mxu0
    %v759 = vadd.f32 0.0, %v758
    %v760 = vpop.f32.mrb[0].mxu0
    %761 = vdwg.mxu0
    %762 = vrot.lane.b32.xlu0 %v172, 56
    %v763 = vpop.permute.xlu0 %762
    %v766 = vsel %vm180, %v685, 0
    %768 = vmatprep.subr.mxu0 0.0
    %769 = vmatpush1.msra.mxu0 %v763
    %770 = vmatprep.subr.mxu0 0.0
    %771 = vmatpush1.msra.mxu0 0.0
    %772 = vmatprep.subr.mxu0 0.0
    %773 = vmatpush1.msra.mxu0 0.0
    %774 = vmatprep.subr.mxu0 0.0
    %775 = vmatpush1.msra.mxu0 0.0
    %776 = vmatprep.subr.mxu0 0.0
    %777 = vmatpush1.msra.mxu0 0.0
    %778 = vmatprep.subr.mxu0 0.0
    %779 = vmatpush1.msra.mxu0 0.0
    %780 = vmatprep.subr.mxu0 0.0
    %781 = vmatpush1.msra.mxu0 0.0
    %782 = vmatprep.subr.mxu0 0.0
    %783 = vmatpush1.msra.mxu0 0.0
    %784 = vmatprep.subr.mxu0 0.0
    %785 = vmatpush1.msra.mxu0 0.0
    %786 = vmatprep.subr.mxu0 0.0
    %787 = vmatpush1.msra.mxu0 0.0
    %788 = vmatprep.subr.mxu0 0.0
    %789 = vmatpush1.msra.mxu0 0.0
    %790 = vmatprep.subr.mxu0 0.0
    %791 = vmatpush1.msra.mxu0 0.0
    %792 = vmatprep.subr.mxu0 0.0
    %793 = vmatpush1.msra.mxu0 0.0
    %794 = vmatprep.subr.mxu0 0.0
    %795 = vmatpush1.msra.mxu0 0.0
    %796 = vmatprep.subr.mxu0 0.0
    %797 = vmatpush1.msra.mxu0 0.0
    %798 = vmatprep.subr.mxu0 0.0
    %799 = vmatpush1.msra.mxu0 0.0
    %800 = vmatprep.subr.mxu0 0.0
    %801 = vmatpush1.msra.mxu0 0.0
    %802 = vmatprep.subr.mxu0 0.0
    %803 = vmatpush1.msra.mxu0 0.0
    %804 = vmatprep.subr.mxu0 0.0
    %805 = vmatpush1.msra.mxu0 0.0
    %806 = vmatprep.subr.mxu0 0.0
    %807 = vmatpush1.msra.mxu0 0.0
    %808 = vmatprep.subr.mxu0 0.0
    %809 = vmatpush1.msra.mxu0 0.0
    %810 = vmatprep.subr.mxu0 0.0
    %811 = vmatpush1.msra.mxu0 0.0
    %812 = vmatprep.subr.mxu0 0.0
    %813 = vmatpush1.msra.mxu0 0.0
    %814 = vmatprep.subr.mxu0 0.0
    %815 = vmatpush1.msra.mxu0 0.0
    %816 = vmatprep.subr.mxu0 0.0
    %817 = vmatpush1.msra.mxu0 0.0
    %818 = vmatprep.subr.mxu0 0.0
    %819 = vmatpush1.msra.mxu0 0.0
    %820 = vmatprep.subr.mxu0 0.0
    %821 = vmatpush1.msra.mxu0 0.0
    %822 = vmatprep.subr.mxu0 0.0
    %823 = vmatpush1.msra.mxu0 0.0
    %824 = vmatprep.subr.mxu0 0.0
    %825 = vmatpush1.msra.mxu0 0.0
    %826 = vmatprep.subr.mxu0 0.0
    %827 = vmatpush1.msra.mxu0 0.0
    %828 = vmatprep.subr.mxu0 0.0
    %829 = vmatpush1.msra.mxu0 0.0
    %830 = vmatprep.subr.mxu0 0.0
    %831 = vmatpush1.msra.mxu0 0.0
    %832 = vmatprep.mubr.f32.mxu0 0.0
    %833 = vmatmul.mubr.f32.gmra.mrb[0].mxu0 %v766
    %v834 = vpop.f32.mrb[0].mxu0
    %v835 = vadd.f32 0.0, %v834
    %v836 = vpop.f32.mrb[0].mxu0
    %837 = vdwg.mxu0
    %838 = vrot.lane.b32.xlu0 %v175, 112
    %v839 = vpop.permute.xlu0 %838
    %840 = vrot.lane.b32.xlu0 %v169, 80
    %v841 = vpop.permute.xlu0 %840
    %v842 = vsel %vm180, %v839, 0
    %v844 = vsel %vm180, %v841, 0
    %846 = vmatprep.subr.mxu0 0.0
    %847 = vmatpush1.xpose.msra.mxu0 %v844
    %848 = vmatprep.subr.mxu0 0.0
    %849 = vmatpush1.xpose.msra.mxu0 0.0
    %850 = vmatprep.subr.mxu0 0.0
    %851 = vmatpush1.xpose.msra.mxu0 0.0
    %852 = vmatprep.subr.mxu0 0.0
    %853 = vmatpush1.xpose.msra.mxu0 0.0
    %854 = vmatprep.subr.mxu0 0.0
    %855 = vmatpush1.xpose.msra.mxu0 0.0
    %856 = vmatprep.subr.mxu0 0.0
    %857 = vmatpush1.xpose.msra.mxu0 0.0
    %858 = vmatprep.subr.mxu0 0.0
    %859 = vmatpush1.xpose.msra.mxu0 0.0
    %860 = vmatprep.subr.mxu0 0.0
    %861 = vmatpush1.xpose.msra.mxu0 0.0
    %862 = vmatprep.subr.mxu0 0.0
    %863 = vmatpush1.xpose.msra.mxu0 0.0
    %864 = vmatprep.subr.mxu0 0.0
    %865 = vmatpush1.xpose.msra.mxu0 0.0
    %866 = vmatprep.subr.mxu0 0.0
    %867 = vmatpush1.xpose.msra.mxu0 0.0
    %868 = vmatprep.subr.mxu0 0.0
    %869 = vmatpush1.xpose.msra.mxu0 0.0
    %870 = vmatprep.subr.mxu0 0.0
    %871 = vmatpush1.xpose.msra.mxu0 0.0
    %872 = vmatprep.subr.mxu0 0.0
    %873 = vmatpush1.xpose.msra.mxu0 0.0
    %874 = vmatprep.subr.mxu0 0.0
    %875 = vmatpush1.xpose.msra.mxu0 0.0
    %876 = vmatprep.subr.mxu0 0.0
    %877 = vmatpush1.xpose.msra.mxu0 0.0
    %878 = vmatprep.subr.mxu0 0.0
    %879 = vmatpush1.xpose.msra.mxu0 0.0
    %880 = vmatprep.subr.mxu0 0.0
    %881 = vmatpush1.xpose.msra.mxu0 0.0
    %882 = vmatprep.subr.mxu0 0.0
    %883 = vmatpush1.xpose.msra.mxu0 0.0
    %884 = vmatprep.subr.mxu0 0.0
    %885 = vmatpush1.xpose.msra.mxu0 0.0
    %886 = vmatprep.subr.mxu0 0.0
    %887 = vmatpush1.xpose.msra.mxu0 0.0
    %888 = vmatprep.subr.mxu0 0.0
    %889 = vmatpush1.xpose.msra.mxu0 0.0
    %890 = vmatprep.subr.mxu0 0.0
    %891 = vmatpush1.xpose.msra.mxu0 0.0
    %892 = vmatprep.subr.mxu0 0.0
    %893 = vmatpush1.xpose.msra.mxu0 0.0
    %894 = vmatprep.subr.mxu0 0.0
    %895 = vmatpush1.xpose.msra.mxu0 0.0
    %896 = vmatprep.subr.mxu0 0.0
    %897 = vmatpush1.xpose.msra.mxu0 0.0
    %898 = vmatprep.subr.mxu0 0.0
    %899 = vmatpush1.xpose.msra.mxu0 0.0
    %900 = vmatprep.subr.mxu0 0.0
    %901 = vmatpush1.xpose.msra.mxu0 0.0
    %902 = vmatprep.subr.mxu0 0.0
    %903 = vmatpush1.xpose.msra.mxu0 0.0
    %904 = vmatprep.subr.mxu0 0.0
    %905 = vmatpush1.xpose.msra.mxu0 0.0
    %906 = vmatprep.subr.mxu0 0.0
    %907 = vmatpush1.xpose.msra.mxu0 0.0
    %908 = vmatprep.subr.mxu0 0.0
    %909 = vmatpush1.xpose.msra.mxu0 0.0
    %910 = vmatprep.mubr.f32.mxu0 0.0
    %911 = vmatmul.mubr.f32.gmra.mrb[0].mxu0 %v842
    %v912 = vpop.f32.mrb[0].mxu0
    %v913 = vadd.f32 0.0, %v912
    %v914 = vpop.f32.mrb[0].mxu0
    %915 = vdwg.mxu0
    %916 = vrot.lane.b32.xlu0 %v176, 112
    %v917 = vpop.permute.xlu0 %916
    %918 = vrot.lane.b32.xlu0 %v172, 80
    %v919 = vpop.permute.xlu0 %918
    %v920 = vsel %vm180, %v917, 0
    %v922 = vsel %vm180, %v919, 0
    %924 = vmatprep.subr.mxu0 0.0
    %925 = vmatpush1.xpose.msra.mxu0 %v922
    %926 = vmatprep.subr.mxu0 0.0
    %927 = vmatpush1.xpose.msra.mxu0 0.0
    %928 = vmatprep.subr.mxu0 0.0
    %929 = vmatpush1.xpose.msra.mxu0 0.0
    %930 = vmatprep.subr.mxu0 0.0
    %931 = vmatpush1.xpose.msra.mxu0 0.0
    %932 = vmatprep.subr.mxu0 0.0
    %933 = vmatpush1.xpose.msra.mxu0 0.0
    %934 = vmatprep.subr.mxu0 0.0
    %935 = vmatpush1.xpose.msra.mxu0 0.0
    %936 = vmatprep.subr.mxu0 0.0
    %937 = vmatpush1.xpose.msra.mxu0 0.0
    %938 = vmatprep.subr.mxu0 0.0
    %939 = vmatpush1.xpose.msra.mxu0 0.0
    %940 = vmatprep.subr.mxu0 0.0
    %941 = vmatpush1.xpose.msra.mxu0 0.0
    %942 = vmatprep.subr.mxu0 0.0
    %943 = vmatpush1.xpose.msra.mxu0 0.0
    %944 = vmatprep.subr.mxu0 0.0
    %945 = vmatpush1.xpose.msra.mxu0 0.0
    %946 = vmatprep.subr.mxu0 0.0
    %947 = vmatpush1.xpose.msra.mxu0 0.0
    %948 = vmatprep.subr.mxu0 0.0
    %949 = vmatpush1.xpose.msra.mxu0 0.0
    %950 = vmatprep.subr.mxu0 0.0
    %951 = vmatpush1.xpose.msra.mxu0 0.0
    %952 = vmatprep.subr.mxu0 0.0
    %953 = vmatpush1.xpose.msra.mxu0 0.0
    %954 = vmatprep.subr.mxu0 0.0
    %955 = vmatpush1.xpose.msra.mxu0 0.0
    %956 = vmatprep.subr.mxu0 0.0
    %957 = vmatpush1.xpose.msra.mxu0 0.0
    %958 = vmatprep.subr.mxu0 0.0
    %959 = vmatpush1.xpose.msra.mxu0 0.0
    %960 = vmatprep.subr.mxu0 0.0
    %961 = vmatpush1.xpose.msra.mxu0 0.0
    %962 = vmatprep.subr.mxu0 0.0
    %963 = vmatpush1.xpose.msra.mxu0 0.0
    %964 = vmatprep.subr.mxu0 0.0
    %965 = vmatpush1.xpose.msra.mxu0 0.0
    %966 = vmatprep.subr.mxu0 0.0
    %967 = vmatpush1.xpose.msra.mxu0 0.0
    %968 = vmatprep.subr.mxu0 0.0
    %969 = vmatpush1.xpose.msra.mxu0 0.0
    %970 = vmatprep.subr.mxu0 0.0
    %971 = vmatpush1.xpose.msra.mxu0 0.0
    %972 = vmatprep.subr.mxu0 0.0
    %973 = vmatpush1.xpose.msra.mxu0 0.0
    %974 = vmatprep.subr.mxu0 0.0
    %975 = vmatpush1.xpose.msra.mxu0 0.0
    %976 = vmatprep.subr.mxu0 0.0
    %977 = vmatpush1.xpose.msra.mxu0 0.0
    %978 = vmatprep.subr.mxu0 0.0
    %979 = vmatpush1.xpose.msra.mxu0 0.0
    %980 = vmatprep.subr.mxu0 0.0
    %981 = vmatpush1.xpose.msra.mxu0 0.0
    %982 = vmatprep.subr.mxu0 0.0
    %983 = vmatpush1.xpose.msra.mxu0 0.0
    %984 = vmatprep.subr.mxu0 0.0
    %985 = vmatpush1.xpose.msra.mxu0 0.0
    %986 = vmatprep.subr.mxu0 0.0
    %987 = vmatpush1.xpose.msra.mxu0 0.0
    %988 = vmatprep.mubr.f32.mxu0 0.0
    %989 = vmatmul.mubr.f32.gmra.mrb[0].mxu0 %v920
    %v990 = vpop.f32.mrb[0].mxu0
    %v991 = vadd.f32 0.0, %v990
    %v992 = vpop.f32.mrb[0].mxu0
    %993 = vdwg.mxu0
    %v994 = vsel %vm180, %v913, -inf
    %995 = vmax.xlane.f32.xlu0 %v994
    %v996 = vpop.xlane.xlu0 %995
    %v997 = vsel %vm180, %v991, -inf
    %998 = vmax.xlane.f32.xlu0 %v997
    %v999 = vpop.xlane.xlu0 %998
    %v1000 = vsub.f32 %v913, %v996
    %v1001 = vsub.f32 %v991, %v999
    %v1002 = vmul.f32 %v1000, 1.442695
    %v1003 = vpow.pop %v1002
    %v1004 = vmul.f32 %v1001, 1.442695
    %v1005 = vpow.pop %v1004
    %v1006 = vsel %vm180, %v1003, 0.0
    %1007 = vadd.xlane.f32.xlu0 %v1006
    %v1008 = vpop.xlane.xlu0 %1007
    %v1009 = vsel %vm180, %v1005, 0.0
    %1010 = vadd.xlane.f32.xlu0 %v1009
    %v1011 = vpop.xlane.xlu0 %1010
    %v1012 = vrcp.pop %v1008
    %v1013 = vrcp.pop %v1011
    %v1014 = vmul.f32 %v1003, %v1012
    %v1015 = vmul.f32 %v1005, %v1013
    %1016 = vrot.lane.b32.xlu0 %v169, 48
    %v1017 = vpop.permute.xlu0 %1016
    %v1020 = vsel %vm180, %v1014, 0
    %1022 = vmatprep.subr.mxu0 0.0
    %1023 = vmatpush1.msra.mxu0 %v1017
    %1024 = vmatprep.subr.mxu0 0.0
    %1025 = vmatpush1.msra.mxu0 0.0
    %1026 = vmatprep.subr.mxu0 0.0
    %1027 = vmatpush1.msra.mxu0 0.0
    %1028 = vmatprep.subr.mxu0 0.0
    %1029 = vmatpush1.msra.mxu0 0.0
    %1030 = vmatprep.subr.mxu0 0.0
    %1031 = vmatpush1.msra.mxu0 0.0
    %1032 = vmatprep.subr.mxu0 0.0
    %1033 = vmatpush1.msra.mxu0 0.0
    %1034 = vmatprep.subr.mxu0 0.0
    %1035 = vmatpush1.msra.mxu0 0.0
    %1036 = vmatprep.subr.mxu0 0.0
    %1037 = vmatpush1.msra.mxu0 0.0
    %1038 = vmatprep.subr.mxu0 0.0
    %1039 = vmatpush1.msra.mxu0 0.0
    %1040 = vmatprep.subr.mxu0 0.0
    %1041 = vmatpush1.msra.mxu0 0.0
    %1042 = vmatprep.subr.mxu0 0.0
    %1043 = vmatpush1.msra.mxu0 0.0
    %1044 = vmatprep.subr.mxu0 0.0
    %1045 = vmatpush1.msra.mxu0 0.0
    %1046 = vmatprep.subr.mxu0 0.0
    %1047 = vmatpush1.msra.mxu0 0.0
    %1048 = vmatprep.subr.mxu0 0.0
    %1049 = vmatpush1.msra.mxu0 0.0
    %1050 = vmatprep.subr.mxu0 0.0
    %1051 = vmatpush1.msra.mxu0 0.0
    %1052 = vmatprep.subr.mxu0 0.0
    %1053 = vmatpush1.msra.mxu0 0.0
    %1054 = vmatprep.subr.mxu0 0.0
    %1055 = vmatpush1.msra.mxu0 0.0
    %1056 = vmatprep.subr.mxu0 0.0
    %1057 = vmatpush1.msra.mxu0 0.0
    %1058 = vmatprep.subr.mxu0 0.0
    %1059 = vmatpush1.msra.mxu0 0.0
    %1060 = vmatprep.subr.mxu0 0.0
    %1061 = vmatpush1.msra.mxu0 0.0
    %1062 = vmatprep.subr.mxu0 0.0
    %1063 = vmatpush1.msra.mxu0 0.0
    %1064 = vmatprep.subr.mxu0 0.0
    %1065 = vmatpush1.msra.mxu0 0.0
    %1066 = vmatprep.subr.mxu0 0.0
    %1067 = vmatpush1.msra.mxu0 0.0
    %1068 = vmatprep.subr.mxu0 0.0
    %1069 = vmatpush1.msra.mxu0 0.0
    %1070 = vmatprep.subr.mxu0 0.0
    %1071 = vmatpush1.msra.mxu0 0.0
    %1072 = vmatprep.subr.mxu0 0.0
    %1073 = vmatpush1.msra.mxu0 0.0
    %1074 = vmatprep.subr.mxu0 0.0
    %1075 = vmatpush1.msra.mxu0 0.0
    %1076 = vmatprep.subr.mxu0 0.0
    %1077 = vmatpush1.msra.mxu0 0.0
    %1078 = vmatprep.subr.mxu0 0.0
    %1079 = vmatpush1.msra.mxu0 0.0
    %1080 = vmatprep.subr.mxu0 0.0
    %1081 = vmatpush1.msra.mxu0 0.0
    %1082 = vmatprep.subr.mxu0 0.0
    %1083 = vmatpush1.msra.mxu0 0.0
    %1084 = vmatprep.subr.mxu0 0.0
    %1085 = vmatpush1.msra.mxu0 0.0
    %1086 = vmatprep.mubr.f32.mxu0 0.0
    %1087 = vmatmul.mubr.f32.gmra.mrb[0].mxu0 %v1020
    %v1088 = vpop.f32.mrb[0].mxu0
    %v1089 = vadd.f32 0.0, %v1088
    %v1090 = vpop.f32.mrb[0].mxu0
    %1091 = vdwg.mxu0
    %1092 = vrot.lane.b32.xlu0 %v172, 48
    %v1093 = vpop.permute.xlu0 %1092
    %v1096 = vsel %vm180, %v1015, 0
    %1098 = vmatprep.subr.mxu0 0.0
    %1099 = vmatpush1.msra.mxu0 %v1093
    %1100 = vmatprep.subr.mxu0 0.0
    %1101 = vmatpush1.msra.mxu0 0.0
    %1102 = vmatprep.subr.mxu0 0.0
    %1103 = vmatpush1.msra.mxu0 0.0
    %1104 = vmatprep.subr.mxu0 0.0
    %1105 = vmatpush1.msra.mxu0 0.0
    %1106 = vmatprep.subr.mxu0 0.0
    %1107 = vmatpush1.msra.mxu0 0.0
    %1108 = vmatprep.subr.mxu0 0.0
    %1109 = vmatpush1.msra.mxu0 0.0
    %1110 = vmatprep.subr.mxu0 0.0
    %1111 = vmatpush1.msra.mxu0 0.0
    %1112 = vmatprep.subr.mxu0 0.0
    %1113 = vmatpush1.msra.mxu0 0.0
    %1114 = vmatprep.subr.mxu0 0.0
    %1115 = vmatpush1.msra.mxu0 0.0
    %1116 = vmatprep.subr.mxu0 0.0
    %1117 = vmatpush1.msra.mxu0 0.0
    %1118 = vmatprep.subr.mxu0 0.0
    %1119 = vmatpush1.msra.mxu0 0.0
    %1120 = vmatprep.subr.mxu0 0.0
    %1121 = vmatpush1.msra.mxu0 0.0
    %1122 = vmatprep.subr.mxu0 0.0
    %1123 = vmatpush1.msra.mxu0 0.0
    %1124 = vmatprep.subr.mxu0 0.0
    %1125 = vmatpush1.msra.mxu0 0.0
    %1126 = vmatprep.subr.mxu0 0.0
    %1127 = vmatpush1.msra.mxu0 0.0
    %1128 = vmatprep.subr.mxu0 0.0
    %1129 = vmatpush1.msra.mxu0 0.0
    %1130 = vmatprep.subr.mxu0 0.0
    %1131 = vmatpush1.msra.mxu0 0.0
    %1132 = vmatprep.subr.mxu0 0.0
    %1133 = vmatpush1.msra.mxu0 0.0
    %1134 = vmatprep.subr.mxu0 0.0
    %1135 = vmatpush1.msra.mxu0 0.0
    %1136 = vmatprep.subr.mxu0 0.0
    %1137 = vmatpush1.msra.mxu0 0.0
    %1138 = vmatprep.subr.mxu0 0.0
    %1139 = vmatpush1.msra.mxu0 0.0
    %1140 = vmatprep.subr.mxu0 0.0
    %1141 = vmatpush1.msra.mxu0 0.0
    %1142 = vmatprep.subr.mxu0 0.0
    %1143 = vmatpush1.msra.mxu0 0.0
    %1144 = vmatprep.subr.mxu0 0.0
    %1145 = vmatpush1.msra.mxu0 0.0
    %1146 = vmatprep.subr.mxu0 0.0
    %1147 = vmatpush1.msra.mxu0 0.0
    %1148 = vmatprep.subr.mxu0 0.0
    %1149 = vmatpush1.msra.mxu0 0.0
    %1150 = vmatprep.subr.mxu0 0.0
    %1151 = vmatpush1.msra.mxu0 0.0
    %1152 = vmatprep.subr.mxu0 0.0
    %1153 = vmatpush1.msra.mxu0 0.0
    %1154 = vmatprep.subr.mxu0 0.0
    %1155 = vmatpush1.msra.mxu0 0.0
    %1156 = vmatprep.subr.mxu0 0.0
    %1157 = vmatpush1.msra.mxu0 0.0
    %1158 = vmatprep.subr.mxu0 0.0
    %1159 = vmatpush1.msra.mxu0 0.0
    %1160 = vmatprep.subr.mxu0 0.0
    %1161 = vmatpush1.msra.mxu0 0.0
    %1162 = vmatprep.mubr.f32.mxu0 0.0
    %1163 = vmatmul.mubr.f32.gmra.mrb[0].mxu0 %v1096
    %v1164 = vpop.f32.mrb[0].mxu0
    %v1165 = vadd.f32 0.0, %v1164
    %v1166 = vpop.f32.mrb[0].mxu0
    %1167 = vdwg.mxu0
    %1168 = vrot.lane.b32.xlu0 %v175, 104
    %v1169 = vpop.permute.xlu0 %1168
    %1170 = vrot.lane.b32.xlu0 %v169, 72
    %v1171 = vpop.permute.xlu0 %1170
    %v1172 = vsel %vm180, %v1169, 0
    %v1174 = vsel %vm180, %v1171, 0
    %1176 = vmatprep.subr.mxu0 0.0
    %1177 = vmatpush1.xpose.msra.mxu0 %v1174
    %1178 = vmatprep.subr.mxu0 0.0
    %1179 = vmatpush1.xpose.msra.mxu0 0.0
    %1180 = vmatprep.subr.mxu0 0.0
    %1181 = vmatpush1.xpose.msra.mxu0 0.0
    %1182 = vmatprep.subr.mxu0 0.0
    %1183 = vmatpush1.xpose.msra.mxu0 0.0
    %1184 = vmatprep.subr.mxu0 0.0
    %1185 = vmatpush1.xpose.msra.mxu0 0.0
    %1186 = vmatprep.subr.mxu0 0.0
    %1187 = vmatpush1.xpose.msra.mxu0 0.0
    %1188 = vmatprep.subr.mxu0 0.0
    %1189 = vmatpush1.xpose.msra.mxu0 0.0
    %1190 = vmatprep.subr.mxu0 0.0
    %1191 = vmatpush1.xpose.msra.mxu0 0.0
    %1192 = vmatprep.subr.mxu0 0.0
    %1193 = vmatpush1.xpose.msra.mxu0 0.0
    %1194 = vmatprep.subr.mxu0 0.0
    %1195 = vmatpush1.xpose.msra.mxu0 0.0
    %1196 = vmatprep.subr.mxu0 0.0
    %1197 = vmatpush1.xpose.msra.mxu0 0.0
    %1198 = vmatprep.subr.mxu0 0.0
    %1199 = vmatpush1.xpose.msra.mxu0 0.0
    %1200 = vmatprep.subr.mxu0 0.0
    %1201 = vmatpush1.xpose.msra.mxu0 0.0
    %1202 = vmatprep.subr.mxu0 0.0
    %1203 = vmatpush1.xpose.msra.mxu0 0.0
    %1204 = vmatprep.subr.mxu0 0.0
    %1205 = vmatpush1.xpose.msra.mxu0 0.0
    %1206 = vmatprep.subr.mxu0 0.0
    %1207 = vmatpush1.xpose.msra.mxu0 0.0
    %1208 = vmatprep.subr.mxu0 0.0
    %1209 = vmatpush1.xpose.msra.mxu0 0.0
    %1210 = vmatprep.subr.mxu0 0.0
    %1211 = vmatpush1.xpose.msra.mxu0 0.0
    %1212 = vmatprep.subr.mxu0 0.0
    %1213 = vmatpush1.xpose.msra.mxu0 0.0
    %1214 = vmatprep.subr.mxu0 0.0
    %1215 = vmatpush1.xpose.msra.mxu0 0.0
    %1216 = vmatprep.subr.mxu0 0.0
    %1217 = vmatpush1.xpose.msra.mxu0 0.0
    %1218 = vmatprep.subr.mxu0 0.0
    %1219 = vmatpush1.xpose.msra.mxu0 0.0
    %1220 = vmatprep.subr.mxu0 0.0
    %1221 = vmatpush1.xpose.msra.mxu0 0.0
    %1222 = vmatprep.subr.mxu0 0.0
    %1223 = vmatpush1.xpose.msra.mxu0 0.0
    %1224 = vmatprep.subr.mxu0 0.0
    %1225 = vmatpush1.xpose.msra.mxu0 0.0
    %1226 = vmatprep.subr.mxu0 0.0
    %1227 = vmatpush1.xpose.msra.mxu0 0.0
    %1228 = vmatprep.subr.mxu0 0.0
    %1229 = vmatpush1.xpose.msra.mxu0 0.0
    %1230 = vmatprep.subr.mxu0 0.0
    %1231 = vmatpush1.xpose.msra.mxu0 0.0
    %1232 = vmatprep.subr.mxu0 0.0
    %1233 = vmatpush1.xpose.msra.mxu0 0.0
    %1234 = vmatprep.subr.mxu0 0.0
    %1235 = vmatpush1.xpose.msra.mxu0 0.0
    %1236 = vmatprep.subr.mxu0 0.0
    %1237 = vmatpush1.xpose.msra.mxu0 0.0
    %1238 = vmatprep.subr.mxu0 0.0
    %1239 = vmatpush1.xpose.msra.mxu0 0.0
    %1240 = vmatprep.mubr.f32.mxu0 0.0
    %1241 = vmatmul.mubr.f32.gmra.mrb[0].mxu0 %v1172
    %v1242 = vpop.f32.mrb[0].mxu0
    %v1243 = vadd.f32 0.0, %v1242
    %v1244 = vpop.f32.mrb[0].mxu0
    %1245 = vdwg.mxu0
    %1246 = vrot.lane.b32.xlu0 %v176, 104
    %v1247 = vpop.permute.xlu0 %1246
    %1248 = vrot.lane.b32.xlu0 %v172, 72
    %v1249 = vpop.permute.xlu0 %1248
    %v1250 = vsel %vm180, %v1247, 0
    %v1252 = vsel %vm180, %v1249, 0
    %1254 = vmatprep.subr.mxu0 0.0
    %1255 = vmatpush1.xpose.msra.mxu0 %v1252
    %1256 = vmatprep.subr.mxu0 0.0
    %1257 = vmatpush1.xpose.msra.mxu0 0.0
    %1258 = vmatprep.subr.mxu0 0.0
    %1259 = vmatpush1.xpose.msra.mxu0 0.0
    %1260 = vmatprep.subr.mxu0 0.0
    %1261 = vmatpush1.xpose.msra.mxu0 0.0
    %1262 = vmatprep.subr.mxu0 0.0
    %1263 = vmatpush1.xpose.msra.mxu0 0.0
    %1264 = vmatprep.subr.mxu0 0.0
    %1265 = vmatpush1.xpose.msra.mxu0 0.0
    %1266 = vmatprep.subr.mxu0 0.0
    %1267 = vmatpush1.xpose.msra.mxu0 0.0
    %1268 = vmatprep.subr.mxu0 0.0
    %1269 = vmatpush1.xpose.msra.mxu0 0.0
    %1270 = vmatprep.subr.mxu0 0.0
    %1271 = vmatpush1.xpose.msra.mxu0 0.0
    %1272 = vmatprep.subr.mxu0 0.0
    %1273 = vmatpush1.xpose.msra.mxu0 0.0
    %1274 = vmatprep.subr.mxu0 0.0
    %1275 = vmatpush1.xpose.msra.mxu0 0.0
    %1276 = vmatprep.subr.mxu0 0.0
    %1277 = vmatpush1.xpose.msra.mxu0 0.0
    %1278 = vmatprep.subr.mxu0 0.0
    %1279 = vmatpush1.xpose.msra.mxu0 0.0
    %1280 = vmatprep.subr.mxu0 0.0
    %1281 = vmatpush1.xpose.msra.mxu0 0.0
    %1282 = vmatprep.subr.mxu0 0.0
    %1283 = vmatpush1.xpose.msra.mxu0 0.0
    %1284 = vmatprep.subr.mxu0 0.0
    %1285 = vmatpush1.xpose.msra.mxu0 0.0
    %1286 = vmatprep.subr.mxu0 0.0
    %1287 = vmatpush1.xpose.msra.mxu0 0.0
    %1288 = vmatprep.subr.mxu0 0.0
    %1289 = vmatpush1.xpose.msra.mxu0 0.0
    %1290 = vmatprep.subr.mxu0 0.0
    %1291 = vmatpush1.xpose.msra.mxu0 0.0
    %1292 = vmatprep.subr.mxu0 0.0
    %1293 = vmatpush1.xpose.msra.mxu0 0.0
    %1294 = vmatprep.subr.mxu0 0.0
    %1295 = vmatpush1.xpose.msra.mxu0 0.0
    %1296 = vmatprep.subr.mxu0 0.0
    %1297 = vmatpush1.xpose.msra.mxu0 0.0
    %1298 = vmatprep.subr.mxu0 0.0
    %1299 = vmatpush1.xpose.msra.mxu0 0.0
    %1300 = vmatprep.subr.mxu0 0.0
    %1301 = vmatpush1.xpose.msra.mxu0 0.0
    %1302 = vmatprep.subr.mxu0 0.0
    %1303 = vmatpush1.xpose.msra.mxu0 0.0
    %1304 = vmatprep.subr.mxu0 0.0
    %1305 = vmatpush1.xpose.msra.mxu0 0.0
    %1306 = vmatprep.subr.mxu0 0.0
    %1307 = vmatpush1.xpose.msra.mxu0 0.0
    %1308 = vmatprep.subr.mxu0 0.0
    %1309 = vmatpush1.xpose.msra.mxu0 0.0
    %1310 = vmatprep.subr.mxu0 0.0
    %1311 = vmatpush1.xpose.msra.mxu0 0.0
    %1312 = vmatprep.subr.mxu0 0.0
    %1313 = vmatpush1.xpose.msra.mxu0 0.0
    %1314 = vmatprep.subr.mxu0 0.0
    %1315 = vmatpush1.xpose.msra.mxu0 0.0
    %1316 = vmatprep.subr.mxu0 0.0
    %1317 = vmatpush1.xpose.msra.mxu0 0.0
    %1318 = vmatprep.mubr.f32.mxu0 0.0
    %1319 = vmatmul.mubr.f32.gmra.mrb[0].mxu0 %v1250
    %v1320 = vpop.f32.mrb[0].mxu0
    %v1321 = vadd.f32 0.0, %v1320
    %v1322 = vpop.f32.mrb[0].mxu0
    %1323 = vdwg.mxu0
    %v1324 = vsel %vm180, %v1243, -inf
    %1325 = vmax.xlane.f32.xlu0 %v1324
    %v1326 = vpop.xlane.xlu0 %1325
    %v1327 = vsel %vm180, %v1321, -inf
    %1328 = vmax.xlane.f32.xlu0 %v1327
    %v1329 = vpop.xlane.xlu0 %1328
    %v1330 = vsub.f32 %v1243, %v1326
    %v1331 = vsub.f32 %v1321, %v1329
    %v1332 = vmul.f32 %v1330, 1.442695
    %v1333 = vpow.pop %v1332
    %v1334 = vmul.f32 %v1331, 1.442695
    %v1335 = vpow.pop %v1334
    %v1336 = vsel %vm180, %v1333, 0.0
    %1337 = vadd.xlane.f32.xlu0 %v1336
    %v1338 = vpop.xlane.xlu0 %1337
    %v1339 = vsel %vm180, %v1335, 0.0
    %1340 = vadd.xlane.f32.xlu0 %v1339
    %v1341 = vpop.xlane.xlu0 %1340
    %v1342 = vrcp.pop %v1338
    %v1343 = vrcp.pop %v1341
    %v1344 = vmul.f32 %v1333, %v1342
    %v1345 = vmul.f32 %v1335, %v1343
    %1346 = vrot.lane.b32.xlu0 %v169, 40
    %v1347 = vpop.permute.xlu0 %1346
    %v1350 = vsel %vm180, %v1344, 0
    %1352 = vmatprep.subr.mxu0 0.0
    %1353 = vmatpush1.msra.mxu0 %v1347
    %1354 = vmatprep.subr.mxu0 0.0
    %1355 = vmatpush1.msra.mxu0 0.0
    %1356 = vmatprep.subr.mxu0 0.0
    %1357 = vmatpush1.msra.mxu0 0.0
    %1358 = vmatprep.subr.mxu0 0.0
    %1359 = vmatpush1.msra.mxu0 0.0
    %1360 = vmatprep.subr.mxu0 0.0
    %1361 = vmatpush1.msra.mxu0 0.0
    %1362 = vmatprep.subr.mxu0 0.0
    %1363 = vmatpush1.msra.mxu0 0.0
    %1364 = vmatprep.subr.mxu0 0.0
    %1365 = vmatpush1.msra.mxu0 0.0
    %1366 = vmatprep.subr.mxu0 0.0
    %1367 = vmatpush1.msra.mxu0 0.0
    %1368 = vmatprep.subr.mxu0 0.0
    %1369 = vmatpush1.msra.mxu0 0.0
    %1370 = vmatprep.subr.mxu0 0.0
    %1371 = vmatpush1.msra.mxu0 0.0
    %1372 = vmatprep.subr.mxu0 0.0
    %1373 = vmatpush1.msra.mxu0 0.0
    %1374 = vmatprep.subr.mxu0 0.0
    %1375 = vmatpush1.msra.mxu0 0.0
    %1376 = vmatprep.subr.mxu0 0.0
    %1377 = vmatpush1.msra.mxu0 0.0
    %1378 = vmatprep.subr.mxu0 0.0
    %1379 = vmatpush1.msra.mxu0 0.0
    %1380 = vmatprep.subr.mxu0 0.0
    %1381 = vmatpush1.msra.mxu0 0.0
    %1382 = vmatprep.subr.mxu0 0.0
    %1383 = vmatpush1.msra.mxu0 0.0
    %1384 = vmatprep.subr.mxu0 0.0
    %1385 = vmatpush1.msra.mxu0 0.0
    %1386 = vmatprep.subr.mxu0 0.0
    %1387 = vmatpush1.msra.mxu0 0.0
    %1388 = vmatprep.subr.mxu0 0.0
    %1389 = vmatpush1.msra.mxu0 0.0
    %1390 = vmatprep.subr.mxu0 0.0
    %1391 = vmatpush1.msra.mxu0 0.0
    %1392 = vmatprep.subr.mxu0 0.0
    %1393 = vmatpush1.msra.mxu0 0.0
    %1394 = vmatprep.subr.mxu0 0.0
    %1395 = vmatpush1.msra.mxu0 0.0
    %1396 = vmatprep.subr.mxu0 0.0
    %1397 = vmatpush1.msra.mxu0 0.0
    %1398 = vmatprep.subr.mxu0 0.0
    %1399 = vmatpush1.msra.mxu0 0.0
    %1400 = vmatprep.subr.mxu0 0.0
    %1401 = vmatpush1.msra.mxu0 0.0
    %1402 = vmatprep.subr.mxu0 0.0
    %1403 = vmatpush1.msra.mxu0 0.0
    %1404 = vmatprep.subr.mxu0 0.0
    %1405 = vmatpush1.msra.mxu0 0.0
    %1406 = vmatprep.subr.mxu0 0.0
    %1407 = vmatpush1.msra.mxu0 0.0
    %1408 = vmatprep.subr.mxu0 0.0
    %1409 = vmatpush1.msra.mxu0 0.0
    %1410 = vmatprep.subr.mxu0 0.0
    %1411 = vmatpush1.msra.mxu0 0.0
    %1412 = vmatprep.subr.mxu0 0.0
    %1413 = vmatpush1.msra.mxu0 0.0
    %1414 = vmatprep.subr.mxu0 0.0
    %1415 = vmatpush1.msra.mxu0 0.0
    %1416 = vmatprep.mubr.f32.mxu0 0.0
    %1417 = vmatmul.mubr.f32.gmra.mrb[0].mxu0 %v1350
    %v1418 = vpop.f32.mrb[0].mxu0
    %v1419 = vadd.f32 0.0, %v1418
    %v1420 = vpop.f32.mrb[0].mxu0
    %1421 = vdwg.mxu0
    %1422 = vrot.lane.b32.xlu0 %v172, 40
    %v1423 = vpop.permute.xlu0 %1422
    %v1426 = vsel %vm180, %v1345, 0
    %1428 = vmatprep.subr.mxu0 0.0
    %1429 = vmatpush1.msra.mxu0 %v1423
    %1430 = vmatprep.subr.mxu0 0.0
    %1431 = vmatpush1.msra.mxu0 0.0
    %1432 = vmatprep.subr.mxu0 0.0
    %1433 = vmatpush1.msra.mxu0 0.0
    %1434 = vmatprep.subr.mxu0 0.0
    %1435 = vmatpush1.msra.mxu0 0.0
    %1436 = vmatprep.subr.mxu0 0.0
    %1437 = vmatpush1.msra.mxu0 0.0
    %1438 = vmatprep.subr.mxu0 0.0
    %1439 = vmatpush1.msra.mxu0 0.0
    %1440 = vmatprep.subr.mxu0 0.0
    %1441 = vmatpush1.msra.mxu0 0.0
    %1442 = vmatprep.subr.mxu0 0.0
    %1443 = vmatpush1.msra.mxu0 0.0
    %1444 = vmatprep.subr.mxu0 0.0
    %1445 = vmatpush1.msra.mxu0 0.0
    %1446 = vmatprep.subr.mxu0 0.0
    %1447 = vmatpush1.msra.mxu0 0.0
    %1448 = vmatprep.subr.mxu0 0.0
    %1449 = vmatpush1.msra.mxu0 0.0
    %1450 = vmatprep.subr.mxu0 0.0
    %1451 = vmatpush1.msra.mxu0 0.0
    %1452 = vmatprep.subr.mxu0 0.0
    %1453 = vmatpush1.msra.mxu0 0.0
    %1454 = vmatprep.subr.mxu0 0.0
    %1455 = vmatpush1.msra.mxu0 0.0
    %1456 = vmatprep.subr.mxu0 0.0
    %1457 = vmatpush1.msra.mxu0 0.0
    %1458 = vmatprep.subr.mxu0 0.0
    %1459 = vmatpush1.msra.mxu0 0.0
    %1460 = vmatprep.subr.mxu0 0.0
    %1461 = vmatpush1.msra.mxu0 0.0
    %1462 = vmatprep.subr.mxu0 0.0
    %1463 = vmatpush1.msra.mxu0 0.0
    %1464 = vmatprep.subr.mxu0 0.0
    %1465 = vmatpush1.msra.mxu0 0.0
    %1466 = vmatprep.subr.mxu0 0.0
    %1467 = vmatpush1.msra.mxu0 0.0
    %1468 = vmatprep.subr.mxu0 0.0
    %1469 = vmatpush1.msra.mxu0 0.0
    %1470 = vmatprep.subr.mxu0 0.0
    %1471 = vmatpush1.msra.mxu0 0.0
    %1472 = vmatprep.subr.mxu0 0.0
    %1473 = vmatpush1.msra.mxu0 0.0
    %1474 = vmatprep.subr.mxu0 0.0
    %1475 = vmatpush1.msra.mxu0 0.0
    %1476 = vmatprep.subr.mxu0 0.0
    %1477 = vmatpush1.msra.mxu0 0.0
    %1478 = vmatprep.subr.mxu0 0.0
    %1479 = vmatpush1.msra.mxu0 0.0
    %1480 = vmatprep.subr.mxu0 0.0
    %1481 = vmatpush1.msra.mxu0 0.0
    %1482 = vmatprep.subr.mxu0 0.0
    %1483 = vmatpush1.msra.mxu0 0.0
    %1484 = vmatprep.subr.mxu0 0.0
    %1485 = vmatpush1.msra.mxu0 0.0
    %1486 = vmatprep.subr.mxu0 0.0
    %1487 = vmatpush1.msra.mxu0 0.0
    %1488 = vmatprep.subr.mxu0 0.0
    %1489 = vmatpush1.msra.mxu0 0.0
    %1490 = vmatprep.subr.mxu0 0.0
    %1491 = vmatpush1.msra.mxu0 0.0
    %1492 = vmatprep.mubr.f32.mxu0 0.0
    %1493 = vmatmul.mubr.f32.gmra.mrb[0].mxu0 %v1426
    %v1494 = vpop.f32.mrb[0].mxu0
    %v1495 = vadd.f32 0.0, %v1494
    %v1496 = vpop.f32.mrb[0].mxu0
    %1497 = vdwg.mxu0
    %1500 = vrot.lane.b32.xlu0 %v759, 8
    %v1501 = vpop.permute.xlu0 %1500
    %1502 = vrot.lane.b32.xlu0 %v835, 8
    %v1503 = vpop.permute.xlu0 %1502
    %1508 = vrot.lane.b32.xlu0 %v1089, 16
    %v1509 = vpop.permute.xlu0 %1508
    %1510 = vrot.lane.b32.xlu0 %v1165, 16
    %v1511 = vpop.permute.xlu0 %1510
    %1516 = vrot.lane.b32.xlu0 %v1419, 24
    %v1517 = vpop.permute.xlu0 %1516
    %1518 = vrot.lane.b32.xlu0 %v1495, 24
    %v1519 = vpop.permute.xlu0 %1518
    %v1522 = vsel %vm180, %v429, %v1501
    %v1523 = vsel %vm180, %v505, %v1503
    %vm1524 = vcmask 130048
    %v1525 = vsel %vm1524, %v1522, %v1509
    %v1526 = vsel %vm1524, %v1523, %v1511
    %vm1527 = vcmask 195584
    %v1528 = vsel %vm1527, %v1525, %v1517
    %v1529 = vsel %vm1527, %v1526, %v1519
    %v1530 = vpack.c.bf16 %v1529, %v1528
    %v1531 = vld [vmem:[#allocation7] sm:$0xff]
    %v1532 = vld [vmem:[#allocation7 + $0x8] sm:$0xff]
    %v1533 = vld [vmem:[#allocation7 + $0x10] sm:$0xff]
    %v1534 = vld [vmem:[#allocation7 + $0x18] sm:$0xff]
    %v1535 = vpack.c.bf16 %v1532, %v1531
    %v1536 = vpack.c.bf16 %v1534, %v1533
    %v1537 = vld [vmem:[%s6] sm:$0x1]
    %v1539 = vlaneseq
    %v1540 = vshrl.u32 %v1539, 7
    %v1541 = vsub.s32 0, %v1540
    %v1542 = vrot.slane %v1537, %v1541
    %v1545 = vsel %vm71, %v1530, 0
    %1547 = vmatprep.subr.bf16.mxu0 0
    %1548 = vmatpush1.bf16.msra.mxu0 %v1535
    %1549 = vmatprep.subr.bf16.mxu0 0
    %1550 = vmatpush1.bf16.msra.mxu0 %v1536
    %1551 = vmatprep.subr.bf16.mxu0 0
    %1552 = vmatpush1.bf16.msra.mxu0 0
    %1553 = vmatprep.subr.bf16.mxu0 0
    %1554 = vmatpush1.bf16.msra.mxu0 0
    %1555 = vmatprep.subr.bf16.mxu0 0
    %1556 = vmatpush1.bf16.msra.mxu0 0
    %1557 = vmatprep.subr.bf16.mxu0 0
    %1558 = vmatpush1.bf16.msra.mxu0 0
    %1559 = vmatprep.subr.bf16.mxu0 0
    %1560 = vmatpush1.bf16.msra.mxu0 0
    %1561 = vmatprep.subr.bf16.mxu0 0
    %1562 = vmatpush1.bf16.msra.mxu0 0
    %1563 = vmatprep.subr.bf16.mxu0 0
    %1564 = vmatpush1.bf16.msra.mxu0 0
    %1565 = vmatprep.subr.bf16.mxu0 0
    %1566 = vmatpush1.bf16.msra.mxu0 0
    %1567 = vmatprep.subr.bf16.mxu0 0
    %1568 = vmatpush1.bf16.msra.mxu0 0
    %1569 = vmatprep.subr.bf16.mxu0 0
    %1570 = vmatpush1.bf16.msra.mxu0 0
    %1571 = vmatprep.subr.bf16.mxu0 0
    %1572 = vmatpush1.bf16.msra.mxu0 0
    %1573 = vmatprep.subr.bf16.mxu0 0
    %1574 = vmatpush1.bf16.msra.mxu0 0
    %1575 = vmatprep.subr.bf16.mxu0 0
    %1576 = vmatpush1.bf16.msra.mxu0 0
    %1577 = vmatprep.subr.bf16.mxu0 0
    %1578 = vmatpush1.bf16.msra.mxu0 0
    %1579 = vmatprep.mubr.bf16.mxu0 0
    %1580 = vmatmul.mubr.bf16.gmra.mrb[0].mxu0 %v1545
    %v1581 = vpop.f32.mrb[0].mxu0
    %v1582 = vadd.f32 %v1542, %v1581
    %v1583 = vpop.f32.mrb[0].mxu0
    %v1584 = vpop.f32.mrb[0].mxu0
    %v1585 = vadd.f32 %v1542, %v1584
    %v1586 = vpop.f32.mrb[0].mxu0
    %1587 = vdwg.mxu0
    %1588 = vst.msk [vmem:[#allocation8] sm:$0xff] %vm71, %v1582
    %1589 = vst.msk [vmem:[#allocation8 + $0x8] sm:$0xff] %vm71, %v1585
    // Predicated region
    $region42: #{tpu_custom_call.1} parent=1 // pred_check
      _
    $region43: #{tpu_custom_call.1} parent=1 // pred_check_branch
      %1591 = sbr.rel (0) target = $region45
    $region44: #{tpu_custom_call.1} parent=1 // pred_region
      %s1593 = ssub.s32 256, 256
      %1594 = vsyncadd [#allocation4], %s1593
      %s1595 = sshll.u32 [#allocation8], 4
      %s1596 = int_to_ptr.vmem [resolvable:$true] %s1595
      %1601 = dma.vmem_to_hbm [thread:$0]  %s1596, 256, %s7, [#allocation4], 128, 128, 8
    $region45: #{tpu_custom_call.1} parent=1 // pred_fallthru
      _
    // Predicated region
    $region46: #{tpu_custom_call.1} parent=1 // pred_check
      _
    $region47: #{tpu_custom_call.1} parent=1 // pred_check_branch
      %1603 = sbr.rel (0) target = $region49
    $region48: #{tpu_custom_call.1} parent=1 // pred_region
      %1604 = dma.done [#allocation4], 256
    $region49: #{tpu_custom_call.1} parent=1 // pred_fallthru
      _
    %1605 = vsyncpa [#allocation3], 1
    %1606 = vsyncpa [#allocation6], 1
    %1607 = vsyncpa [#allocation4], 1

</llo_original>
